<compile_context>
chip_gen: v5e
topology: v5e:2x2
jax: 0.10.0
libtpu: 0.0.40
codegen_flags: <defaults>
</compile_context>

<pallas_src>
import functools
import math

import jax
import jax.numpy as jnp
from jax import lax
from jax.experimental import pallas as pl
from jax.experimental.pallas import tpu as pltpu

LANE = 128


def _round_up(x, m):
    return -(-x // m) * m


# ----------------------------------------------------------------------------
# Kernel construction (parameter-only preprocessing, plain JAX glue).
# ----------------------------------------------------------------------------
def construct_kernel_3_1d(weight, P1, dilation_d):
    """weight, P1: (Cout, Cin/g, Kd, Kh, Kw) -> (Cout, Cin/g, dilation_d*Kd, Kh, Kw)."""
    Cout, Cin_g, Kd, Kh, Kw = weight.shape
    Dd = dilation_d * Kd
    half_bot = Dd // 2
    half_top = (Dd - 1) - half_bot
    # positions relative to the dilated-kernel center, clamped to the valid range
    p = jnp.clip(P1, -float(half_bot), float(half_top)) + float(half_bot)  # in [0, Dd-1]
    pf = jnp.floor(p)
    rest = p - pf
    pfi = pf.astype(jnp.int32)

    targets = jnp.arange(Dd, dtype=jnp.int32)
    sel0 = (pfi[..., None] == targets).astype(weight.dtype)        # floor bin
    # ceil bin; with the clamp above, rest == 0 whenever pfi+1 == Dd, so no
    # interpolation mass is dropped by the out-of-range ceil bin.
    sel1 = ((pfi + 1)[..., None] == targets).astype(weight.dtype)
    contrib = weight[..., None] * ((1.0 - rest)[..., None] * sel0 + rest[..., None] * sel1)
    K = contrib.sum(axis=2)          # (Cout, Cin/g, Kh, Kw, Dd) — sum the Kd taps
    K = jnp.moveaxis(K, -1, 2)       # (Cout, Cin/g, Dd, Kh, Kw)
    return K


# ----------------------------------------------------------------------------
# Pallas conv kernel body.
#   grid = (N, groups, Dout, Dd)     (last axis = depth-tap reduction)
#   x_ref : (1, 1, Hp, Wp, Cpi)      one padded depth slab, one group
#   w_ref : (1, 1, Kh*Kw*Cpi, Cpo)   one depth tap of im2col-flattened weights
#   b_ref : (1, 1, Cpo)              f32 bias (padded)
#   o_ref : (1, 1, Hout, Wout, Cpo)
#   acc_ref : (Hout*Wout, Cpo) f32 scratch accumulator
#   col_ref : (Hout*Wout, Kh*Kw*Cpi) im2col scratch (compute dtype)
# ----------------------------------------------------------------------------
def _dcls_conv_body(ai_ref, na_ref, x_ref, w_ref, b_ref, o_ref, acc_ref, col_ref,
                    *, Dd, Kh, Kw, sh, sw, Hout, Wout, Cpi, Cpo):
    HW = Hout * Wout
    s = pl.program_id(3)                      # depth-tap step (reduction axis)

    @pl.when(s == 0)
    def _init():                              # fold bias into accumulator init
        acc_ref[...] = jnp.broadcast_to(b_ref[0], (HW, Cpo)).astype(jnp.float32)

    @pl.when(s < na_ref[0])                   # skip all-zero (inactive) taps
    def _compute():
        t = 0
        for kh in range(Kh):
            for kw in range(Kw):
                if sh == 1 and sw == 1:
                    patch = x_ref[0, 0, pl.ds(kh, Hout), pl.ds(kw, Wout), :]
                else:
                    raw = x_ref[0, 0,
                                pl.ds(kh, (Hout - 1) * sh + 1),
                                pl.ds(kw, (Wout - 1) * sw + 1), :]
                    patch = raw[::sh, ::sw, :]
                col_ref[:, t * Cpi:(t + 1) * Cpi] = patch.reshape(HW, Cpi)
                t += 1
        # single MXU contraction over Kh*Kw*Cin_pad per depth tap
        acc_ref[...] += jnp.dot(col_ref[...], w_ref[0, 0],
                                preferred_element_type=jnp.float32)

    @pl.when(s == Dd - 1)
    def _store():
        o_ref[0, 0] = acc_ref[...].reshape(Hout, Wout, Cpo).astype(o_ref.dtype)


# ----------------------------------------------------------------------------
# Dcls3_1d forward (public interface matches the PyTorch module: NCDHW in/out).
# ----------------------------------------------------------------------------
def dcls3_1d_forward(x, weight, P, bias, *, stride, padding, dilation, groups=1):
    N, Cin, D, H, W = x.shape
    Cout, Cin_g, Kd, Kh, Kw = weight.shape
    assert Cin % groups == 0 and Cout % groups == 0 and Cin_g == Cin // groups
    Cout_g = Cout // groups
    sd, sh, sw = stride
    dd = dilation[0]
    # Dcls3_1d.__init__ adjusts depth padding by dilation[0] // 2
    pd = padding[0] + dd // 2
    ph, pw = padding[1], padding[2]
    Dd = dd * Kd

    if bias is None:
        bias = jnp.zeros((Cout,), jnp.float32)

    # 1) construct the dilated kernel (parameter-only preprocessing)
    K = construct_kernel_3_1d(weight, P[0], dd)            # (Cout, Cin_g, Dd, Kh, Kw)

    # Active depth taps: only slices with any nonzero weight contribute.
    nz = jnp.any(K != 0.0, axis=(0, 1, 3, 4))              # (Dd,)
    n_active = jnp.maximum(jnp.sum(nz.astype(jnp.int32)), 1).astype(jnp.int32).reshape(1)
    idx = jnp.where(nz, jnp.arange(Dd, dtype=jnp.int32), Dd)
    idx = jnp.sort(idx)                                    # active taps first
    last_active = idx[n_active[0] - 1]
    # inactive slots repeat the last active tap -> no new DMA, matmul skipped
    active_idx = jnp.clip(jnp.minimum(idx, last_active), 0, Dd - 1).astype(jnp.int32)

    # 2) channels-last, per-group, lane-padded (128) layouts
    Cpi = _round_up(Cin_g, LANE)
    Cpo = _round_up(Cout_g, LANE)

    xg = x.reshape(N, groups, Cin_g, D, H, W)
    xg = jnp.transpose(xg, (0, 3, 4, 5, 1, 2))             # (N, D, H, W, G, Cin_g)
    xg = jnp.pad(xg, ((0, 0), (pd, pd), (ph, ph), (pw, pw), (0, 0), (0, Cpi - Cin_g)))
    Dp, Hp, Wp = D + 2 * pd, H + 2 * ph, W + 2 * pw
    x_in = xg.reshape(N, Dp, Hp, Wp, groups * Cpi)

    Kt = K.reshape(groups, Cout_g, Cin_g, Dd, Kh, Kw)
    Kt = jnp.transpose(Kt, (0, 3, 4, 5, 2, 1))             # (G, Dd, Kh, Kw, Cin_g, Cout_g)
    Kt = jnp.pad(Kt, ((0, 0), (0, 0), (0, 0), (0, 0),
                      (0, Cpi - Cin_g), (0, Cpo - Cout_g)))
    w_in = Kt.reshape(groups, Dd, Kh * Kw * Cpi, Cpo).astype(x.dtype)

    b_in = jnp.pad(bias.astype(jnp.float32).reshape(groups, 1, Cout_g),
                   ((0, 0), (0, 0), (0, Cpo - Cout_g)))    # bias stays f32

    Dout = (Dp - Dd) // sd + 1
    Hout = (Hp - Kh) // sh + 1
    Wout = (Wp - Kw) // sw + 1
    HW = Hout * Wout

    kernel = functools.partial(_dcls_conv_body, Dd=Dd, Kh=Kh, Kw=Kw, sh=sh, sw=sw,
                               Hout=Hout, Wout=Wout, Cpi=Cpi, Cpo=Cpo)

    out = pl.pallas_call(
        kernel,
        out_shape=jax.ShapeDtypeStruct((N, Dout, Hout, Wout, groups * Cpo), x.dtype),
        grid_spec=pltpu.PrefetchScalarGridSpec(
            num_scalar_prefetch=2,                         # active_idx, n_active
            grid=(N, groups, Dout, Dd),
            in_specs=[
                # one padded depth slab of the current group per step
                pl.BlockSpec((1, 1, Hp, Wp, Cpi),
                             lambda n, g, do, s, ai, na: (n, do * sd + ai[s], 0, 0, g)),
                # one depth tap of im2col-flattened weights
                pl.BlockSpec((1, 1, Kh * Kw * Cpi, Cpo),
                             lambda n, g, do, s, ai, na: (g, ai[s], 0, 0)),
                # f32 bias row for this group
                pl.BlockSpec((1, 1, Cpo),
                             lambda n, g, do, s, ai, na: (g, 0, 0)),
            ],
            out_specs=pl.BlockSpec((1, 1, Hout, Wout, Cpo),
                                   lambda n, g, do, s, ai, na: (n, do, 0, 0, g)),
            scratch_shapes=[pltpu.VMEM((HW, Cpo), jnp.float32),        # accumulator
                            pltpu.VMEM((HW, Kh * Kw * Cpi), x.dtype)],  # im2col buf
        ),
        compiler_params=pltpu.CompilerParams(
            dimension_semantics=("parallel", "parallel", "parallel", "arbitrary"),
            vmem_limit_bytes=48 * 1024 * 1024,             # fits v5e/v6e/v7x
        ),
    )(active_idx, n_active, x_in, w_in, b_in)

    # strip channel padding, back to NCDHW
    out = out.reshape(N, Dout, Hout, Wout, groups, Cpo)[..., :Cout_g]
    out = jnp.transpose(out, (0, 4, 5, 1, 2, 3)).reshape(N, Cout, Dout, Hout, Wout)
    return out


# ----------------------------------------------------------------------------
# Demo / self-check
# ----------------------------------------------------------------------------
if __name__ == "__main__":
    def run_check(N, Cin, Cout, D, H, W, kernel_size, stride, padding, dilation,
                  groups, seed):
        Kd, Kh, Kw = kernel_size
        fan_in = (Cin // groups) * Kd * Kh * Kw
        bound = 1.0 / math.sqrt(fan_in)            # kaiming_uniform_(a=sqrt(5)) bound

        key = jax.random.PRNGKey(seed)
        k1, k2, k3, k4 = jax.random.split(key, 4)
        weight = jax.random.uniform(k1, (Cout, Cin // groups, Kd, Kh, Kw),
                                    jnp.float32, -bound, bound)
        bias = jax.random.uniform(k2, (Cout,), jnp.float32, -bound, bound)
        P = jax.random.uniform(k3, (1, Cout, Cin // groups, Kd, Kh, Kw),
                               jnp.float32, -bound, bound)
        x = jax.random.normal(k4, (N, Cin, D, H, W), jnp.float32)

        out = dcls3_1d_forward(x, weight, P, bias, stride=stride, padding=padding,
                               dilation=dilation, groups=groups)
        out = jax.block_until_ready(out)

        # pure-JAX reference for the conv step (same constructed kernel)
        Kc = construct_kernel_3_1d(weight, P[0], dilation[0])
        pad_eff = (padding[0] + dilation[0] // 2, padding[1], padding[2])
        ref = lax.conv_general_dilated(
            x, Kc, window_strides=stride,
            padding=[(pad_eff[0],) * 2, (pad_eff[1],) * 2, (pad_eff[2],) * 2],
            dimension_numbers=("NCDHW", "OIDHW", "NCDHW"),
            feature_group_count=groups)
        ref = ref + bias[None, :, None, None, None]

        assert out.shape == ref.shape, (out.shape, ref.shape)
        max_err = float(jnp.max(jnp.abs(out - ref)))
        assert max_err < 1e-4, f"mismatch vs reference conv: {max_err}"

    # small shapes consistent with the module (Dcls3_1d defaults)
    run_check(2, 4, 8, 8, 8, 8, (3, 3, 3), (1, 1, 1), (1, 1, 1), (4, 1, 1), 1, 0)
    # grouped variant (exercises the folded group grid axis)
    run_check(2, 4, 8, 8, 8, 8, (3, 3, 3), (1, 1, 1), (1, 1, 1), (3, 1, 1), 2, 1)
    print("KERNEL_OK")
</pallas_src>

<mosaic_0001>
module attributes {stable_mosaic.version = 11 : i64} {
  func.func @_dcls_conv_body(%arg0: i32, %arg1: i32, %arg2: i32, %arg3: i32, %arg4: memref<12xi32, #tpu.memory_space<smem>>, %arg5: memref<1xi32, #tpu.memory_space<smem>>, %arg6: memref<1x1x10x10x128xf32, #tpu.memory_space<vmem>>, %arg7: memref<1x1x1152x128xf32, #tpu.memory_space<vmem>>, %arg8: memref<1x1x128xf32, #tpu.memory_space<vmem>>, %arg9: memref<1x1x8x8x128xf32, #tpu.memory_space<vmem>>, %arg10: memref<64x128xf32, #tpu.memory_space<vmem>>, %arg11: memref<64x1152xf32, #tpu.memory_space<vmem>>) attributes {dimension_semantics = [#tpu.dimension_semantics<parallel>, #tpu.dimension_semantics<parallel>, #tpu.dimension_semantics<parallel>, #tpu.dimension_semantics<arbitrary>], iteration_bounds = array<i64: 2, 1, 3, 12>, scalar_prefetch = 2 : i64, scratch_operands = 2 : i64, tpu.core_type = #tpu.core_type<tc>, window_params = [{transform_indices = @transform_0, window_bounds = array<i64: 1, 1, 10, 10, 128>}, {transform_indices = @transform_1, window_bounds = array<i64: 1, 1, 1152, 128>}, {transform_indices = @transform_2, window_bounds = array<i64: 1, 1, 128>}, {transform_indices = @transform_3, window_bounds = array<i64: 1, 1, 8, 8, 128>}]} {
    %c0_i32 = arith.constant 0 : i32
    %0 = arith.cmpi eq, %arg3, %c0_i32 : i32
    %1 = arith.extui %0 : i1 to i32
    %c0_i32_0 = arith.constant 0 : i32
    %2 = arith.cmpi ne, %1, %c0_i32_0 : i32
    scf.if %2 {
      %c0_3 = arith.constant 0 : index
      %c0_4 = arith.constant 0 : index
      %c0_5 = arith.constant 0 : index
      %10 = vector.load %arg8[%c0_3, %c0_4, %c0_5] : memref<1x1x128xf32, #tpu.memory_space<vmem>>, vector<1x1x128xf32>
      %11 = vector.shape_cast %10 : vector<1x1x128xf32> to vector<1x128xf32>
      %12 = vector.shape_cast %11 : vector<1x128xf32> to vector<1x128xf32>
      %13 = vector.broadcast %12 : vector<1x128xf32> to vector<64x128xf32>
      %c0_6 = arith.constant 0 : index
      %c0_7 = arith.constant 0 : index
      %14 = vector.load %arg10[%c0_6, %c0_7] : memref<64x128xf32, #tpu.memory_space<vmem>>, vector<64x128xf32>
      tpu.vector_store %arg10[%c0_6, %c0_7], %13 {strides = array<i32>} : memref<64x128xf32, #tpu.memory_space<vmem>>, vector<64x128xf32>,
    } else {
    }
    %c0 = arith.constant 0 : index
    %3 = memref.load %arg5[%c0] : memref<1xi32, #tpu.memory_space<smem>>
    %4 = arith.cmpi slt, %arg3, %3 : i32
    %5 = arith.extui %4 : i1 to i32
    %c0_i32_1 = arith.constant 0 : i32
    %6 = arith.cmpi ne, %5, %c0_i32_1 : i32
    scf.if %6 {
      %c0_3 = arith.constant 0 : index
      %c0_4 = arith.constant 0 : index
      %c0_5 = arith.constant 0 : index
      %c0_6 = arith.constant 0 : index
      %c0_7 = arith.constant 0 : index
      %10 = vector.load %arg6[%c0_3, %c0_4, %c0_5, %c0_6, %c0_7] : memref<1x1x10x10x128xf32, #tpu.memory_space<vmem>>, vector<1x1x8x8x128xf32>
      %11 = vector.shape_cast %10 : vector<1x1x8x8x128xf32> to vector<8x8x128xf32>
      %12 = vector.shape_cast %11 : vector<8x8x128xf32> to vector<64x128xf32>
      %c0_8 = arith.constant 0 : index
      %c0_9 = arith.constant 0 : index
      %13 = vector.load %arg11[%c0_8, %c0_9] : memref<64x1152xf32, #tpu.memory_space<vmem>>, vector<64x128xf32>
      tpu.vector_store %arg11[%c0_8, %c0_9], %12 {strides = array<i32>} : memref<64x1152xf32, #tpu.memory_space<vmem>>, vector<64x128xf32>,
      %c0_10 = arith.constant 0 : index
      %c0_11 = arith.constant 0 : index
      %c0_12 = arith.constant 0 : index
      %c1 = arith.constant 1 : index
      %c0_13 = arith.constant 0 : index
      %14 = vector.load %arg6[%c0_10, %c0_11, %c0_12, %c1, %c0_13] : memref<1x1x10x10x128xf32, #tpu.memory_space<vmem>>, vector<1x1x8x8x128xf32>
      %15 = vector.shape_cast %14 : vector<1x1x8x8x128xf32> to vector<8x8x128xf32>
      %16 = vector.shape_cast %15 : vector<8x8x128xf32> to vector<64x128xf32>
      %c0_14 = arith.constant 0 : index
      %c128 = arith.constant 128 : index
      %17 = vector.load %arg11[%c0_14, %c128] : memref<64x1152xf32, #tpu.memory_space<vmem>>, vector<64x128xf32>
      tpu.vector_store %arg11[%c0_14, %c128], %16 {strides = array<i32>} : memref<64x1152xf32, #tpu.memory_space<vmem>>, vector<64x128xf32>,
      %c0_15 = arith.constant 0 : index
      %c0_16 = arith.constant 0 : index
      %c0_17 = arith.constant 0 : index
      %c2 = arith.constant 2 : index
      %c0_18 = arith.constant 0 : index
      %18 = vector.load %arg6[%c0_15, %c0_16, %c0_17, %c2, %c0_18] : memref<1x1x10x10x128xf32, #tpu.memory_space<vmem>>, vector<1x1x8x8x128xf32>
      %19 = vector.shape_cast %18 : vector<1x1x8x8x128xf32> to vector<8x8x128xf32>
      %20 = vector.shape_cast %19 : vector<8x8x128xf32> to vector<64x128xf32>
      %c0_19 = arith.constant 0 : index
      %c256 = arith.constant 256 : index
      %21 = vector.load %arg11[%c0_19, %c256] : memref<64x1152xf32, #tpu.memory_space<vmem>>, vector<64x128xf32>
      tpu.vector_store %arg11[%c0_19, %c256], %20 {strides = array<i32>} : memref<64x1152xf32, #tpu.memory_space<vmem>>, vector<64x128xf32>,
      %c0_20 = arith.constant 0 : index
      %c0_21 = arith.constant 0 : index
      %c1_22 = arith.constant 1 : index
      %c0_23 = arith.constant 0 : index
      %c0_24 = arith.constant 0 : index
      %22 = vector.load %arg6[%c0_20, %c0_21, %c1_22, %c0_23, %c0_24] : memref<1x1x10x10x128xf32, #tpu.memory_space<vmem>>, vector<1x1x8x8x128xf32>
      %23 = vector.shape_cast %22 : vector<1x1x8x8x128xf32> to vector<8x8x128xf32>
      %24 = vector.shape_cast %23 : vector<8x8x128xf32> to vector<64x128xf32>
      %c0_25 = arith.constant 0 : index
      %c384 = arith.constant 384 : index
      %25 = vector.load %arg11[%c0_25, %c384] : memref<64x1152xf32, #tpu.memory_space<vmem>>, vector<64x128xf32>
      tpu.vector_store %arg11[%c0_25, %c384], %24 {strides = array<i32>} : memref<64x1152xf32, #tpu.memory_space<vmem>>, vector<64x128xf32>,
      %c0_26 = arith.constant 0 : index
      %c0_27 = arith.constant 0 : index
      %c1_28 = arith.constant 1 : index
      %c1_29 = arith.constant 1 : index
      %c0_30 = arith.constant 0 : index
      %26 = vector.load %arg6[%c0_26, %c0_27, %c1_28, %c1_29, %c0_30] : memref<1x1x10x10x128xf32, #tpu.memory_space<vmem>>, vector<1x1x8x8x128xf32>
      %27 = vector.shape_cast %26 : vector<1x1x8x8x128xf32> to vector<8x8x128xf32>
      %28 = vector.shape_cast %27 : vector<8x8x128xf32> to vector<64x128xf32>
      %c0_31 = arith.constant 0 : index
      %c512 = arith.constant 512 : index
      %29 = vector.load %arg11[%c0_31, %c512] : memref<64x1152xf32, #tpu.memory_space<vmem>>, vector<64x128xf32>
      tpu.vector_store %arg11[%c0_31, %c512], %28 {strides = array<i32>} : memref<64x1152xf32, #tpu.memory_space<vmem>>, vector<64x128xf32>,
      %c0_32 = arith.constant 0 : index
      %c0_33 = arith.constant 0 : index
      %c1_34 = arith.constant 1 : index
      %c2_35 = arith.constant 2 : index
      %c0_36 = arith.constant 0 : index
      %30 = vector.load %arg6[%c0_32, %c0_33, %c1_34, %c2_35, %c0_36] : memref<1x1x10x10x128xf32, #tpu.memory_space<vmem>>, vector<1x1x8x8x128xf32>
      %31 = vector.shape_cast %30 : vector<1x1x8x8x128xf32> to vector<8x8x128xf32>
      %32 = vector.shape_cast %31 : vector<8x8x128xf32> to vector<64x128xf32>
      %c0_37 = arith.constant 0 : index
      %c640 = arith.constant 640 : index
      %33 = vector.load %arg11[%c0_37, %c640] : memref<64x1152xf32, #tpu.memory_space<vmem>>, vector<64x128xf32>
      tpu.vector_store %arg11[%c0_37, %c640], %32 {strides = array<i32>} : memref<64x1152xf32, #tpu.memory_space<vmem>>, vector<64x128xf32>,
      %c0_38 = arith.constant 0 : index
      %c0_39 = arith.constant 0 : index
      %c2_40 = arith.constant 2 : index
      %c0_41 = arith.constant 0 : index
      %c0_42 = arith.constant 0 : index
      %34 = vector.load %arg6[%c0_38, %c0_39, %c2_40, %c0_41, %c0_42] : memref<1x1x10x10x128xf32, #tpu.memory_space<vmem>>, vector<1x1x8x8x128xf32>
      %35 = vector.shape_cast %34 : vector<1x1x8x8x128xf32> to vector<8x8x128xf32>
      %36 = vector.shape_cast %35 : vector<8x8x128xf32> to vector<64x128xf32>
      %c0_43 = arith.constant 0 : index
      %c768 = arith.constant 768 : index
      %37 = vector.load %arg11[%c0_43, %c768] : memref<64x1152xf32, #tpu.memory_space<vmem>>, vector<64x128xf32>
      tpu.vector_store %arg11[%c0_43, %c768], %36 {strides = array<i32>} : memref<64x1152xf32, #tpu.memory_space<vmem>>, vector<64x128xf32>,
      %c0_44 = arith.constant 0 : index
      %c0_45 = arith.constant 0 : index
      %c2_46 = arith.constant 2 : index
      %c1_47 = arith.constant 1 : index
      %c0_48 = arith.constant 0 : index
      %38 = vector.load %arg6[%c0_44, %c0_45, %c2_46, %c1_47, %c0_48] : memref<1x1x10x10x128xf32, #tpu.memory_space<vmem>>, vector<1x1x8x8x128xf32>
      %39 = vector.shape_cast %38 : vector<1x1x8x8x128xf32> to vector<8x8x128xf32>
      %40 = vector.shape_cast %39 : vector<8x8x128xf32> to vector<64x128xf32>
      %c0_49 = arith.constant 0 : index
      %c896 = arith.constant 896 : index
      %41 = vector.load %arg11[%c0_49, %c896] : memref<64x1152xf32, #tpu.memory_space<vmem>>, vector<64x128xf32>
      tpu.vector_store %arg11[%c0_49, %c896], %40 {strides = array<i32>} : memref<64x1152xf32, #tpu.memory_space<vmem>>, vector<64x128xf32>,
      %c0_50 = arith.constant 0 : index
      %c0_51 = arith.constant 0 : index
      %c2_52 = arith.constant 2 : index
      %c2_53 = arith.constant 2 : index
      %c0_54 = arith.constant 0 : index
      %42 = vector.load %arg6[%c0_50, %c0_51, %c2_52, %c2_53, %c0_54] : memref<1x1x10x10x128xf32, #tpu.memory_space<vmem>>, vector<1x1x8x8x128xf32>
      %43 = vector.shape_cast %42 : vector<1x1x8x8x128xf32> to vector<8x8x128xf32>
      %44 = vector.shape_cast %43 : vector<8x8x128xf32> to vector<64x128xf32>
      %c0_55 = arith.constant 0 : index
      %c1024 = arith.constant 1024 : index
      %45 = vector.load %arg11[%c0_55, %c1024] : memref<64x1152xf32, #tpu.memory_space<vmem>>, vector<64x128xf32>
      tpu.vector_store %arg11[%c0_55, %c1024], %44 {strides = array<i32>} : memref<64x1152xf32, #tpu.memory_space<vmem>>, vector<64x128xf32>,
      %c0_56 = arith.constant 0 : index
      %c0_57 = arith.constant 0 : index
      %46 = vector.load %arg10[%c0_56, %c0_57] : memref<64x128xf32, #tpu.memory_space<vmem>>, vector<64x128xf32>
      %c0_58 = arith.constant 0 : index
      %c0_59 = arith.constant 0 : index
      %47 = vector.load %arg11[%c0_58, %c0_59] : memref<64x1152xf32, #tpu.memory_space<vmem>>, vector<64x1152xf32>
      %c0_60 = arith.constant 0 : index
      %c0_61 = arith.constant 0 : index
      %c0_62 = arith.constant 0 : index
      %c0_63 = arith.constant 0 : index
      %48 = vector.load %arg7[%c0_60, %c0_61, %c0_62, %c0_63] : memref<1x1x1152x128xf32, #tpu.memory_space<vmem>>, vector<1x1x1152x128xf32>
      %49 = vector.shape_cast %48 : vector<1x1x1152x128xf32> to vector<1152x128xf32>
      %cst = arith.constant dense<0.000000e+00> : vector<64x128xf32>
      %50 = tpu.matmul %47, %49, %cst {dimension_numbers = #tpu.dot_dimension_numbers<[1], [0], [0], [1], [0, 0, 1, 1], [], []>} : vector<64x1152xf32>, vector<1152x128xf32>, vector<64x128xf32> -> vector<64x128xf32>
      %51 = arith.addf %46, %50 : vector<64x128xf32>
      %c0_64 = arith.constant 0 : index
      %c0_65 = arith.constant 0 : index
      %52 = vector.load %arg10[%c0_64, %c0_65] : memref<64x128xf32, #tpu.memory_space<vmem>>, vector<64x128xf32>
      tpu.vector_store %arg10[%c0_64, %c0_65], %51 {strides = array<i32>} : memref<64x128xf32, #tpu.memory_space<vmem>>, vector<64x128xf32>,
    } else {
    }
    %c11_i32 = arith.constant 11 : i32
    %7 = arith.cmpi eq, %arg3, %c11_i32 : i32
    %8 = arith.extui %7 : i1 to i32
    %c0_i32_2 = arith.constant 0 : i32
    %9 = arith.cmpi ne, %8, %c0_i32_2 : i32
    scf.if %9 {
      %c0_3 = arith.constant 0 : index
      %c0_4 = arith.constant 0 : index
      %10 = vector.load %arg10[%c0_3, %c0_4] : memref<64x128xf32, #tpu.memory_space<vmem>>, vector<64x128xf32>
      %11 = vector.shape_cast %10 : vector<64x128xf32> to vector<8x8x128xf32>
      %c0_5 = arith.constant 0 : index
      %c0_6 = arith.constant 0 : index
      %c0_7 = arith.constant 0 : index
      %c0_8 = arith.constant 0 : index
      %c0_9 = arith.constant 0 : index
      %12 = vector.load %arg9[%c0_5, %c0_6, %c0_7, %c0_8, %c0_9] : memref<1x1x8x8x128xf32, #tpu.memory_space<vmem>>, vector<1x1x8x8x128xf32>
      %13 = vector.shape_cast %12 : vector<1x1x8x8x128xf32> to vector<8x8x128xf32>
      %14 = vector.shape_cast %11 : vector<8x8x128xf32> to vector<1x1x8x8x128xf32>
      tpu.vector_store %arg9[%c0_5, %c0_6, %c0_7, %c0_8, %c0_9], %14 {strides = array<i32>} : memref<1x1x8x8x128xf32, #tpu.memory_space<vmem>>, vector<1x1x8x8x128xf32>,
    } else {
    }
    return
  }
  func.func @transform_0(%arg0: i32, %arg1: i32, %arg2: i32, %arg3: i32, %arg4: memref<12xi32, #tpu.memory_space<smem>>, %arg5: memref<1xi32, #tpu.memory_space<smem>>) -> (i32, i32, i32, i32, i32) {
    %c1_i32 = arith.constant 1 : i32
    %0 = arith.muli %arg2, %c1_i32 : i32
    %1 = arith.index_cast %arg3 : i32 to index
    %2 = memref.load %arg4[%1] : memref<12xi32, #tpu.memory_space<smem>>
    %3 = arith.addi %0, %2 : i32
    %c0_i32 = arith.constant 0 : i32
    %c0_i32_0 = arith.constant 0 : i32
    %c0_i32_1 = arith.constant 0 : i32
    return %arg0, %3, %c0_i32, %c0_i32_0, %arg1 : i32, i32, i32, i32, i32
  }
  func.func @transform_1(%arg0: i32, %arg1: i32, %arg2: i32, %arg3: i32, %arg4: memref<12xi32, #tpu.memory_space<smem>>, %arg5: memref<1xi32, #tpu.memory_space<smem>>) -> (i32, i32, i32, i32) {
    %0 = arith.index_cast %arg3 : i32 to index
    %1 = memref.load %arg4[%0] : memref<12xi32, #tpu.memory_space<smem>>
    %c0_i32 = arith.constant 0 : i32
    %c0_i32_0 = arith.constant 0 : i32
    %c0_i32_1 = arith.constant 0 : i32
    return %arg1, %1, %c0_i32, %c0_i32_0 : i32, i32, i32, i32
  }
  func.func @transform_2(%arg0: i32, %arg1: i32, %arg2: i32, %arg3: i32, %arg4: memref<12xi32, #tpu.memory_space<smem>>, %arg5: memref<1xi32, #tpu.memory_space<smem>>) -> (i32, i32, i32) {
    %c0_i32 = arith.constant 0 : i32
    %c0_i32_0 = arith.constant 0 : i32
    %c0_i32_1 = arith.constant 0 : i32
    return %arg1, %c0_i32, %c0_i32_0 : i32, i32, i32
  }
  func.func @transform_3(%arg0: i32, %arg1: i32, %arg2: i32, %arg3: i32, %arg4: memref<12xi32, #tpu.memory_space<smem>>, %arg5: memref<1xi32, #tpu.memory_space<smem>>) -> (i32, i32, i32, i32, i32) {
    %c0_i32 = arith.constant 0 : i32
    %c0_i32_0 = arith.constant 0 : i32
    %c0_i32_1 = arith.constant 0 : i32
    return %arg0, %arg2, %c0_i32, %c0_i32_0, %arg1 : i32, i32, i32, i32, i32
  }
}

</mosaic_0001>

<llo_original>
// kernel: tpu_custom_call.1
$region0: #{tpu_custom_call.1}
  #allocation0 [shape = 'u32[]', space=smem, size = 0x4, offset = 0x4, fixed_abs, tag = 'smem constant byte address 0x4 - core index']
  #allocation1 [shape = 'u32[72,128]{1,0:T(1,128)}', space=vmem, size = 0x9000, scoped, tag = 'internal scratch']
  #allocation2 [shape = 'f32[64,128]{1,0:T(8,128)}', space=vmem, size = 0x8000, scoped, tag = 'scratch operand']
  #allocation3 [shape = 'f32[64,1152]{1,0:T(8,128)}', space=vmem, size = 0x48000, scoped, tag = 'scratch operand']
  #allocation4 [shape = 's32[1]{0}', space=sflag, size = 0x4, scoped, tag = 'scoped memory for tpu_custom_call.1']
  #allocation5 [shape = 'u8[512]{0}', space=smem, size = 0x200, scoped, tag = 'prefetched SMEM operand 0']
  #allocation6 [shape = 's32[1]{0:T(128)S(6)}', space=smem, size = 0x200, scoped, tag = 'prefetched SMEM operand 1']
  %s0 = inlined_call_operand.vmem [shape: s32[12], index: 0, kind: input, shape index: {}]
  %s1 = inlined_call_operand.<no memory space> [shape: s32[1], index: 1, kind: input, shape index: {}]
  %s2 = inlined_call_operand.vmem [shape: f32[2,14,10,10,128], index: 2, kind: input, shape index: {}]
  %s3 = inlined_call_operand.hbm [shape: f32[1,12,1152,128], index: 3, kind: input, shape index: {}]
  %s4 = inlined_call_operand.vmem [shape: f32[1,1,128], index: 4, kind: input, shape index: {}]
  %s5 = inlined_call_operand.hbm [shape: f32[2,3,8,8,128], index: 5, kind: output, shape index: {}]
  %s6 = sld [smem:[#allocation0]]
  $region61: #{tpu_custom_call.1} parent=0
    _
  %s8 = ssub.s32 1, %s6
  %s9 = scalar_select 0, %s8, %s6
  %s11 = sshll.u32 %s0, 4
  %s12 = int_to_ptr.vmem [resolvable:$true] %s11
  %14 = dma.vmem_to_smem %s12, 16, [#allocation5], [#allocation4]
  %15 = sst [smem:[#allocation6]] %s1
  %17 = dma.done [#allocation4], 16
  %18 = sfence
  $region1: #{tpu_custom_call.1} parent=0
    #allocation7 [shape = 'u8[1179648]{0}', space=vmem, size = 0x120000, scoped, tag = 'input window, operand 3']
    #allocation8 [shape = 's32[2]{0}', space=sflag, size = 0x8, scoped, tag = 'scoped memory for tpu_custom_call.1']
    #allocation9 [shape = 's32[2]{0}', space=sflag, size = 0x8, scoped, tag = 'scoped memory for tpu_custom_call.1']
    #allocation10 [shape = 'u8[65536]{0}', space=vmem, size = 0x10000, scoped, tag = 'output window, operand 0']
    %19 = vsyncpa [#allocation8], 0
    %s20 = scalar_lea.sflag [#allocation8], 1
    %21 = vsyncpa %s20, 0
    %22 = vsyncpa [#allocation9], 0
    %s23 = scalar_lea.sflag [#allocation9], 1
    %24 = vsyncpa %s23, 0
    loop: start=0, step=1, limit=74
    $region2: #{tpu_custom_call.1} parent=1 // loop_pre_header
      _
    $region3: #{tpu_custom_call.1} parent=1 // loop_header
      %s26 = sphi 0, %s30
      %p27 = scmp.ge.s32.totalorder %s26, 74
      %s33 = sphi 0, %s59
      %s34 = sphi 0, %s55
      %s35 = sphi 0, %s51
      %s36 = sphi 0, %s47
      %s37 = sphi 0, %s33
      %s38 = sphi 0, %s34
      %s39 = sphi 0, %s35
      %s40 = sphi 0, %s36
      %s41 = sphi 0, %s37
      %s42 = sphi 0, %s38
      %s43 = sphi 0, %s39
      %s44 = sphi 0, %s40
      %s70 = sphi 0, %s72
      %s73 = sphi 0, %s70
      %s74 = sphi 0, %s73
      %s90 = sphi 0, %s74
      %s100 = sphi 0, %s102
      %s103 = sphi 0, %s100
      %s104 = sphi 0, %s103
      %s120 = sphi 0, %s104
      %s126 = sphi 0, %s128
      %s129 = sphi 0, %s126
      %s130 = sphi 0, %s129
      %s146 = sphi 0, %s130
      %s156 = sphi 0, %s158
      %s159 = sphi 0, %s156
      %s160 = sphi 0, %s159
      %s176 = sphi 0, %s160
    $region4: #{tpu_custom_call.1} parent=1 // loop_header_branch
      %29 = sbr.rel (%p27) target = $region8
    $region5: #{tpu_custom_call.1} parent=1 // loop_body
      %s31 = ssub.s32 %s26, 1
      %s32 = ssub.s32 %s26, 2
      %s45 = sadd.s32 1, %s36
      %p46 = scmp.ge.s32.totalorder %s45, 12
      %s47 = scalar_select %p46, 0, %s45
      %s48 = sadd.s32 1, %s35
      %s49 = scalar_select %p46, %s48, %s35
      %p50 = scmp.ge.s32.totalorder %s49, 3
      %s51 = scalar_select %p50, 0, %s49
      %s52 = sadd.s32 1, %s34
      %s53 = scalar_select %p50, %s52, %s34
      %p54 = scmp.ge.s32.totalorder %s53, 1
      %s55 = scalar_select %p54, 0, %s53
      %s56 = sadd.s32 1, %s33
      %s57 = scalar_select %p54, %s56, %s33
      %p58 = scmp.ge.s32.totalorder %s57, 2
      %s59 = scalar_select %p58, 0, %s57
      %s60 = sld [smem:[#allocation5 + %s36]]
      %s61 = sadd.s32 %s35, %s60
      %s62 = sld [smem:[#allocation5 + %s47]]
      %s63 = sadd.s32 %s51, %s62
      %s64 = ssub.s32 %s33, %s59
      %s65 = ssub.s32 %s61, %s63
      %s66 = sor.u32 %s64, %s65
      %s67 = ssub.s32 %s34, %s55
      %s68 = sor.u32 %s66, %s67
      %p69 = scmp.eq.s32.totalorder %s68, 0
      %s71 = sadd.s32 %s70, 1
      %s72 = scalar_select %p69, %s70, %s71
      %p75 = pneg %p69
      %p76 = scmp.eq.s32.totalorder %s26, 71
      %p77 = por %p75, %p76
      %p78 = scmp.ne.s32.totalorder %s70, %s73
      %p79 = scmp.eq.s32.totalorder %s26, 0
      %p80 = por %p78, %p79
      %p81 = scmp.ne.s32.totalorder %s70, %s73
      %p82 = scmp.eq.s32.totalorder %s31, 71
      %p83 = por %p81, %p82
      %p84 = scmp.ne.s32.totalorder %s73, %s74
      %p85 = scmp.eq.s32.totalorder %s31, 0
      %p86 = por %p84, %p85
      %p87 = scmp.ne.s32.totalorder %s73, %s74
      %p88 = scmp.eq.s32.totalorder %s32, 71
      %p89 = por %p87, %p88
      %p91 = scmp.ne.s32.totalorder %s74, %s90
      %p92 = scmp.eq.s32.totalorder %s32, 0
      %p93 = por %p91, %p92
      %s94 = sld [smem:[#allocation5 + %s36]]
      %s95 = sld [smem:[#allocation5 + %s47]]
      %s96 = ssub.s32 %s34, %s55
      %s97 = ssub.s32 %s94, %s95
      %s98 = sor.u32 %s96, %s97
      %p99 = scmp.eq.s32.totalorder %s98, 0
      %s101 = sadd.s32 %s100, 1
      %s102 = scalar_select %p99, %s100, %s101
      %p105 = pneg %p99
      %p106 = scmp.eq.s32.totalorder %s26, 71
      %p107 = por %p105, %p106
      %p108 = scmp.ne.s32.totalorder %s100, %s103
      %p109 = scmp.eq.s32.totalorder %s26, 0
      %p110 = por %p108, %p109
      %p111 = scmp.ne.s32.totalorder %s100, %s103
      %p112 = scmp.eq.s32.totalorder %s31, 71
      %p113 = por %p111, %p112
      %p114 = scmp.ne.s32.totalorder %s103, %s104
      %p115 = scmp.eq.s32.totalorder %s31, 0
      %p116 = por %p114, %p115
      %p117 = scmp.ne.s32.totalorder %s103, %s104
      %p118 = scmp.eq.s32.totalorder %s32, 71
      %p119 = por %p117, %p118
      %p121 = scmp.ne.s32.totalorder %s104, %s120
      %p122 = scmp.eq.s32.totalorder %s32, 0
      %p123 = por %p121, %p122
      %s124 = ssub.s32 %s34, %s55
      %p125 = scmp.eq.s32.totalorder %s124, 0
      %s127 = sadd.s32 %s126, 1
      %s128 = scalar_select %p125, %s126, %s127
      %p131 = pneg %p125
      %p132 = scmp.eq.s32.totalorder %s26, 71
      %p133 = por %p131, %p132
      %p134 = scmp.ne.s32.totalorder %s126, %s129
      %p135 = scmp.eq.s32.totalorder %s26, 0
      %p136 = por %p134, %p135
      %p137 = scmp.ne.s32.totalorder %s126, %s129
      %p138 = scmp.eq.s32.totalorder %s31, 71
      %p139 = por %p137, %p138
      %p140 = scmp.ne.s32.totalorder %s129, %s130
      %p141 = scmp.eq.s32.totalorder %s31, 0
      %p142 = por %p140, %p141
      %p143 = scmp.ne.s32.totalorder %s129, %s130
      %p144 = scmp.eq.s32.totalorder %s32, 71
      %p145 = por %p143, %p144
      %p147 = scmp.ne.s32.totalorder %s130, %s146
      %p148 = scmp.eq.s32.totalorder %s32, 0
      %p149 = por %p147, %p148
      %s150 = ssub.s32 %s33, %s59
      %s151 = ssub.s32 %s35, %s51
      %s152 = sor.u32 %s150, %s151
      %s153 = ssub.s32 %s34, %s55
      %s154 = sor.u32 %s152, %s153
      %p155 = scmp.eq.s32.totalorder %s154, 0
      %s157 = sadd.s32 %s156, 1
      %s158 = scalar_select %p155, %s156, %s157
      %p161 = pneg %p155
      %p162 = scmp.eq.s32.totalorder %s26, 71
      %p163 = por %p161, %p162
      %p164 = scmp.ne.s32.totalorder %s156, %s159
      %p165 = scmp.eq.s32.totalorder %s26, 0
      %p166 = por %p164, %p165
      %p167 = scmp.ne.s32.totalorder %s156, %s159
      %p168 = scmp.eq.s32.totalorder %s31, 71
      %p169 = por %p167, %p168
      %p170 = scmp.ne.s32.totalorder %s159, %s160
      %p171 = scmp.eq.s32.totalorder %s31, 0
      %p172 = por %p170, %p171
      %p173 = scmp.ne.s32.totalorder %s159, %s160
      %p174 = scmp.eq.s32.totalorder %s32, 71
      %p175 = por %p173, %p174
      %p177 = scmp.ne.s32.totalorder %s160, %s176
      %p178 = scmp.eq.s32.totalorder %s32, 0
      %p179 = por %p177, %p178
      %p180 = scmp.le.s32.totalorder 1, %s26
      %p181 = scmp.lt.s32.totalorder %s26, 73
      %p182 = pnand %p180, %p181
      %p183 = pneg %p182
      // Predicated region
      $region9: #{tpu_custom_call.1} parent=5 // pred_check
        _
      $region10: #{tpu_custom_call.1} parent=5 // pred_check_branch
        %185 = sbr.rel (%p182) target = $region12
      $region11: #{tpu_custom_call.1} parent=5 // pred_region
        %s186 = ssub.s32 %s26, 1
        // Predicated region
        $region13: #{tpu_custom_call.1} parent=11 // pred_check
          %p187 = pneg %p142
        $region14: #{tpu_custom_call.1} parent=11 // pred_check_branch
          %189 = sbr.rel (%p187) target = $region16
        $region15: #{tpu_custom_call.1} parent=11 // pred_region
          %p190 = scmp.lt.s32.totalorder %s38, 0
          %s191 = scalar_select %p190, %s38, 0
          %s192 = scalar_lea.vmem %s4, %s191
        $region16: #{tpu_custom_call.1} parent=11 // pred_fallthru
          _
      $region12: #{tpu_custom_call.1} parent=5 // pred_fallthru
        _
      %p193 = scmp.lt.s32.totalorder %s26, 72
      // Predicated region
      $region17: #{tpu_custom_call.1} parent=5 // pred_check
        %p194 = pneg %p193
      $region18: #{tpu_custom_call.1} parent=5 // pred_check_branch
        %196 = sbr.rel (%p194) target = $region20
      $region19: #{tpu_custom_call.1} parent=5 // pred_region
        // Predicated region
        $region21: #{tpu_custom_call.1} parent=19 // pred_check
          %p197 = pneg %p80
        $region22: #{tpu_custom_call.1} parent=19 // pred_check_branch
          %199 = sbr.rel (%p197) target = $region24
        $region23: #{tpu_custom_call.1} parent=19 // pred_region
          %s200 = sld [smem:[#allocation5 + %s36]]
          %s201 = sadd.s32 %s35, %s200
          %p202 = scmp.lt.s32.totalorder %s33, 1
          %s203 = scalar_select %p202, %s33, 1
          %p204 = scmp.lt.s32.totalorder %s201, 13
          %s205 = scalar_select %p204, %s201, 13
          %p206 = scmp.lt.s32.totalorder %s34, 0
          %s207 = scalar_select %p206, %s34, 0
          %s208 = smul.addr %s205, 20
          %s209 = sadd.s32 %s207, %s208
          %s210 = smul.addr %s203, 280
          %s211 = sadd.s32 %s209, %s210
          %s212 = smul.addr %s211, 8
          %s213 = scalar_lea.vmem %s2, %s212
          %s214 = sld [smem:[#allocation5 + %s36]]
          %s215 = sadd.s32 %s35, %s214
        $region24: #{tpu_custom_call.1} parent=19 // pred_fallthru
          _
        // Predicated region
        $region25: #{tpu_custom_call.1} parent=19 // pred_check
          %p216 = pneg %p110
        $region26: #{tpu_custom_call.1} parent=19 // pred_check_branch
          %218 = sbr.rel (%p216) target = $region28
        $region27: #{tpu_custom_call.1} parent=19 // pred_region
          %s219 = sand.u32 %s100, 1
          %s220 = scalar_lea.sflag [#allocation8], %s219
          %s221 = sand.u32 %s100, 1
          %s222 = smul.addr %s221, 1152
          %s223 = scalar_lea.vmem [#allocation7], %s222
          %s224 = sld [smem:[#allocation5 + %s36]]
          %226 = vsyncadd %s220, 0
          %s227 = smul.addr %s224, 144
          %s228 = smul.addr %s34, 1728
          %s229 = sadd.s32 %s227, %s228
          %s230 = smul.addr %s229, 8
          %s231 = scalar_lea.hbm %s3, %s230
          %s232 = sshll.u32 %s231, 4
          %s233 = int_to_ptr.hbm [resolvable:$true] %s232
          %s234 = sshll.u32 %s223, 4
          %s235 = int_to_ptr.vmem [resolvable:$true] %s234
          %240 = dma.hbm_to_vmem [thread:$0]  %s233, 18432, %s235, %s220, 128, 128, 8
        $region28: #{tpu_custom_call.1} parent=19 // pred_fallthru
          _
      $region20: #{tpu_custom_call.1} parent=5 // pred_fallthru
        _
      %p241 = scmp.le.s32.totalorder 1, %s26
      %p242 = scmp.lt.s32.totalorder %s26, 73
      %p243 = pnand %p241, %p242
      %p244 = pneg %p243
      // Predicated region
      $region29: #{tpu_custom_call.1} parent=5 // pred_check
        _
      $region30: #{tpu_custom_call.1} parent=5 // pred_check_branch
        %246 = sbr.rel (%p243) target = $region32
      $region31: #{tpu_custom_call.1} parent=5 // pred_region
        %s247 = ssub.s32 %s26, 1
        %s248 = sand.u32 %s103, 1
        %s249 = scalar_lea.sflag [#allocation8], %s248
        %s250 = sand.u32 %s103, 1
        %s251 = smul.addr %s250, 1152
        %s252 = scalar_lea.vmem [#allocation7], %s251
        // Predicated region
        $region33: #{tpu_custom_call.1} parent=31 // pred_check
          %p253 = pneg %p116
        $region34: #{tpu_custom_call.1} parent=31 // pred_check_branch
          %255 = sbr.rel (%p253) target = $region36
        $region35: #{tpu_custom_call.1} parent=31 // pred_region
          %257 = dma.done %s249, 18432
        $region36: #{tpu_custom_call.1} parent=31 // pred_fallthru
          _
        %s258 = sld [smem:[#allocation5 + %s40]]
        %s259 = sadd.s32 %s39, %s258
        %p260 = scmp.lt.s32.totalorder %s37, 1
        %s261 = scalar_select %p260, %s37, 1
        %p262 = scmp.lt.s32.totalorder %s259, 13
        %s263 = scalar_select %p262, %s259, 13
        %p264 = scmp.lt.s32.totalorder %s38, 0
        %s265 = scalar_select %p264, %s38, 0
        %s266 = smul.addr %s263, 20
        %s267 = sadd.s32 %s265, %s266
        %s268 = smul.addr %s261, 280
        %s269 = sadd.s32 %s267, %s268
        %s270 = smul.addr %s269, 8
        %s271 = scalar_lea.vmem %s2, %s270
        %p272 = pneg %p86
        %p273 = pneg %p83
        %s274 = sand.u32 %s103, 1
        %s275 = scalar_lea.sflag [#allocation8], %s274
        %s276 = sand.u32 %s103, 1
        %s277 = smul.addr %s276, 1152
        %s278 = scalar_lea.vmem [#allocation7], %s277
        %p279 = pneg %p116
        %p280 = pneg %p113
        %p281 = scmp.lt.s32.totalorder %s38, 0
        %s282 = scalar_select %p281, %s38, 0
        %s283 = scalar_lea.vmem %s4, %s282
        %p284 = pneg %p142
        %p285 = pneg %p139
        %p286 = pneg %p172
        %p287 = pneg %p169
        %s288 = sand.u32 %s159, 1
        %s289 = scalar_lea.sflag [#allocation9], %s288
        %s290 = sand.u32 %s159, 1
        %s291 = smul.addr %s290, 64
        %s292 = scalar_lea.vmem [#allocation10], %s291
        %s293 = sld [smem:[#allocation5 + %s40]]
        %s294 = sadd.s32 %s39, %s293
        %p295 = scmp.lt.s32.totalorder %s37, 1
        %s296 = scalar_select %p295, %s37, 1
        %p297 = scmp.lt.s32.totalorder %s294, 13
        %s298 = scalar_select %p297, %s294, 13
        %p299 = scmp.lt.s32.totalorder %s38, 0
        %s300 = scalar_select %p299, %s38, 0
        %s301 = smul.addr %s298, 20
        %s302 = sadd.s32 %s300, %s301
        %s303 = smul.addr %s296, 280
        %s304 = sadd.s32 %s302, %s303
        %s305 = smul.addr %s304, 8
        %s306 = scalar_lea.vmem %s2, %s305
        %s307 = sld [smem:[#allocation5 + %s40]]
        %s308 = sadd.s32 %s39, %s307
        %s309 = sld [smem:[#allocation5 + %s40]]
        %p310 = scmp.lt.s32.totalorder %s38, 0
        %s311 = scalar_select %p310, %s38, 0
        %s312 = scalar_lea.vmem %s4, %s311
        %p313 = scmp.eq.s32.totalorder %s40, 0
        // Predicated region
        $region37: #{tpu_custom_call.1} parent=31 // pred_check
          %p314 = pneg %p313
        $region38: #{tpu_custom_call.1} parent=31 // pred_check_branch
          %316 = sbr.rel (%p314) target = $region40
        $region39: #{tpu_custom_call.1} parent=31 // pred_region
          %v317 = vld [vmem:[%s312] sm:$0x1]
          %v319 = vperm.slane %v317, 0
          %321 = vst [vmem:[#allocation2] sm:$0xff] %v319
          %322 = vst [vmem:[#allocation2 + $0x8] sm:$0xff] %v319
          %323 = vst [vmem:[#allocation2 + $0x10] sm:$0xff] %v319
          %324 = vst [vmem:[#allocation2 + $0x18] sm:$0xff] %v319
          %325 = vst [vmem:[#allocation2 + $0x20] sm:$0xff] %v319
          %326 = vst [vmem:[#allocation2 + $0x28] sm:$0xff] %v319
          %327 = vst [vmem:[#allocation2 + $0x30] sm:$0xff] %v319
          %328 = vst [vmem:[#allocation2 + $0x38] sm:$0xff] %v319
        $region40: #{tpu_custom_call.1} parent=31 // pred_fallthru
          _
        %s329 = sld [smem:[#allocation6]]
        %p330 = scmp.lt.s32.totalorder %s40, %s329
        // Predicated region
        $region41: #{tpu_custom_call.1} parent=31 // pred_check
          %p331 = pneg %p330
        $region42: #{tpu_custom_call.1} parent=31 // pred_check_branch
          %333 = sbr.rel (%p331) target = $region44
        $region43: #{tpu_custom_call.1} parent=31 // pred_region
          %v334 = vld [vmem:[%s306] sm:$0xff]
          %v335 = vld [vmem:[%s306 + $0x10] sm:$0xff]
          %v336 = vld [vmem:[%s306 + $0x20] sm:$0xff]
          %v337 = vld [vmem:[%s306 + $0x30] sm:$0xff]
          %v338 = vld [vmem:[%s306 + $0x40] sm:$0xff]
          %v339 = vld [vmem:[%s306 + $0x50] sm:$0xff]
          %v340 = vld [vmem:[%s306 + $0x60] sm:$0xff]
          %v341 = vld [vmem:[%s306 + $0x70] sm:$0xff]
          %342 = vst [vmem:[#allocation3] sm:$0xff] %v334
          %343 = vst [vmem:[#allocation3 + $0x48] sm:$0xff] %v335
          %344 = vst [vmem:[#allocation3 + $0x90] sm:$0xff] %v336
          %345 = vst [vmem:[#allocation3 + $0xd8] sm:$0xff] %v337
          %346 = vst [vmem:[#allocation3 + $0x120] sm:$0xff] %v338
          %347 = vst [vmem:[#allocation3 + $0x168] sm:$0xff] %v339
          %348 = vst [vmem:[#allocation3 + $0x1b0] sm:$0xff] %v340
          %349 = vst [vmem:[#allocation3 + $0x1f8] sm:$0xff] %v341
          %v350 = vld [vmem:[%s306 + $0x1] sm:$0xff]
          %v351 = vld [vmem:[%s306 + $0x11] sm:$0xff]
          %v352 = vld [vmem:[%s306 + $0x21] sm:$0xff]
          %v353 = vld [vmem:[%s306 + $0x31] sm:$0xff]
          %v354 = vld [vmem:[%s306 + $0x41] sm:$0xff]
          %v355 = vld [vmem:[%s306 + $0x51] sm:$0xff]
          %v356 = vld [vmem:[%s306 + $0x61] sm:$0xff]
          %v357 = vld [vmem:[%s306 + $0x71] sm:$0xff]
          %358 = vst [vmem:[#allocation3 + $0x8] sm:$0xff] %v350
          %359 = vst [vmem:[#allocation3 + $0x50] sm:$0xff] %v351
          %360 = vst [vmem:[#allocation3 + $0x98] sm:$0xff] %v352
          %361 = vst [vmem:[#allocation3 + $0xe0] sm:$0xff] %v353
          %362 = vst [vmem:[#allocation3 + $0x128] sm:$0xff] %v354
          %363 = vst [vmem:[#allocation3 + $0x170] sm:$0xff] %v355
          %364 = vst [vmem:[#allocation3 + $0x1b8] sm:$0xff] %v356
          %365 = vst [vmem:[#allocation3 + $0x200] sm:$0xff] %v357
          %v366 = vld [vmem:[%s306 + $0x2] sm:$0xff]
          %v367 = vld [vmem:[%s306 + $0x12] sm:$0xff]
          %v368 = vld [vmem:[%s306 + $0x22] sm:$0xff]
          %v369 = vld [vmem:[%s306 + $0x32] sm:$0xff]
          %v370 = vld [vmem:[%s306 + $0x42] sm:$0xff]
          %v371 = vld [vmem:[%s306 + $0x52] sm:$0xff]
          %v372 = vld [vmem:[%s306 + $0x62] sm:$0xff]
          %v373 = vld [vmem:[%s306 + $0x72] sm:$0xff]
          %374 = vst [vmem:[#allocation3 + $0x10] sm:$0xff] %v366
          %375 = vst [vmem:[#allocation3 + $0x58] sm:$0xff] %v367
          %376 = vst [vmem:[#allocation3 + $0xa0] sm:$0xff] %v368
          %377 = vst [vmem:[#allocation3 + $0xe8] sm:$0xff] %v369
          %378 = vst [vmem:[#allocation3 + $0x130] sm:$0xff] %v370
          %379 = vst [vmem:[#allocation3 + $0x178] sm:$0xff] %v371
          %380 = vst [vmem:[#allocation3 + $0x1c0] sm:$0xff] %v372
          %381 = vst [vmem:[#allocation3 + $0x208] sm:$0xff] %v373
          %s382 = scalar_lea.vmem %s306, 16
          %v383 = vld [vmem:[%s382] sm:$0xff]
          %v384 = vld [vmem:[%s382 + $0x10] sm:$0xff]
          %v385 = vld [vmem:[%s382 + $0x20] sm:$0xff]
          %v386 = vld [vmem:[%s382 + $0x30] sm:$0xff]
          %v387 = vld [vmem:[%s382 + $0x40] sm:$0xff]
          %v388 = vld [vmem:[%s382 + $0x50] sm:$0xff]
          %v389 = vld [vmem:[%s382 + $0x60] sm:$0xff]
          %v390 = vld [vmem:[%s382 + $0x70] sm:$0xff]
          %391 = vst [vmem:[#allocation3 + $0x18] sm:$0xff] %v383
          %392 = vst [vmem:[#allocation3 + $0x60] sm:$0xff] %v384
          %393 = vst [vmem:[#allocation3 + $0xa8] sm:$0xff] %v385
          %394 = vst [vmem:[#allocation3 + $0xf0] sm:$0xff] %v386
          %395 = vst [vmem:[#allocation3 + $0x138] sm:$0xff] %v387
          %396 = vst [vmem:[#allocation3 + $0x180] sm:$0xff] %v388
          %397 = vst [vmem:[#allocation3 + $0x1c8] sm:$0xff] %v389
          %398 = vst [vmem:[#allocation3 + $0x210] sm:$0xff] %v390
          %v399 = vld [vmem:[%s382 + $0x1] sm:$0xff]
          %v400 = vld [vmem:[%s382 + $0x11] sm:$0xff]
          %v401 = vld [vmem:[%s382 + $0x21] sm:$0xff]
          %v402 = vld [vmem:[%s382 + $0x31] sm:$0xff]
          %v403 = vld [vmem:[%s382 + $0x41] sm:$0xff]
          %v404 = vld [vmem:[%s382 + $0x51] sm:$0xff]
          %v405 = vld [vmem:[%s382 + $0x61] sm:$0xff]
          %v406 = vld [vmem:[%s382 + $0x71] sm:$0xff]
          %407 = vst [vmem:[#allocation3 + $0x20] sm:$0xff] %v399
          %408 = vst [vmem:[#allocation3 + $0x68] sm:$0xff] %v400
          %409 = vst [vmem:[#allocation3 + $0xb0] sm:$0xff] %v401
          %410 = vst [vmem:[#allocation3 + $0xf8] sm:$0xff] %v402
          %411 = vst [vmem:[#allocation3 + $0x140] sm:$0xff] %v403
          %412 = vst [vmem:[#allocation3 + $0x188] sm:$0xff] %v404
          %413 = vst [vmem:[#allocation3 + $0x1d0] sm:$0xff] %v405
          %414 = vst [vmem:[#allocation3 + $0x218] sm:$0xff] %v406
          %v415 = vld [vmem:[%s382 + $0x2] sm:$0xff]
          %v416 = vld [vmem:[%s382 + $0x12] sm:$0xff]
          %v417 = vld [vmem:[%s382 + $0x22] sm:$0xff]
          %v418 = vld [vmem:[%s382 + $0x32] sm:$0xff]
          %v419 = vld [vmem:[%s382 + $0x42] sm:$0xff]
          %v420 = vld [vmem:[%s382 + $0x52] sm:$0xff]
          %v421 = vld [vmem:[%s382 + $0x62] sm:$0xff]
          %v422 = vld [vmem:[%s382 + $0x72] sm:$0xff]
          %423 = vst [vmem:[#allocation3 + $0x28] sm:$0xff] %v415
          %424 = vst [vmem:[#allocation3 + $0x70] sm:$0xff] %v416
          %425 = vst [vmem:[#allocation3 + $0xb8] sm:$0xff] %v417
          %426 = vst [vmem:[#allocation3 + $0x100] sm:$0xff] %v418
          %427 = vst [vmem:[#allocation3 + $0x148] sm:$0xff] %v419
          %428 = vst [vmem:[#allocation3 + $0x190] sm:$0xff] %v420
          %429 = vst [vmem:[#allocation3 + $0x1d8] sm:$0xff] %v421
          %430 = vst [vmem:[#allocation3 + $0x220] sm:$0xff] %v422
          %s431 = scalar_lea.vmem %s306, 32
          %v432 = vld [vmem:[%s431] sm:$0xff]
          %v433 = vld [vmem:[%s431 + $0x10] sm:$0xff]
          %v434 = vld [vmem:[%s431 + $0x20] sm:$0xff]
          %v435 = vld [vmem:[%s431 + $0x30] sm:$0xff]
          %v436 = vld [vmem:[%s431 + $0x40] sm:$0xff]
          %v437 = vld [vmem:[%s431 + $0x50] sm:$0xff]
          %v438 = vld [vmem:[%s431 + $0x60] sm:$0xff]
          %v439 = vld [vmem:[%s431 + $0x70] sm:$0xff]
          %440 = vst [vmem:[#allocation3 + $0x30] sm:$0xff] %v432
          %441 = vst [vmem:[#allocation3 + $0x78] sm:$0xff] %v433
          %442 = vst [vmem:[#allocation3 + $0xc0] sm:$0xff] %v434
          %443 = vst [vmem:[#allocation3 + $0x108] sm:$0xff] %v435
          %444 = vst [vmem:[#allocation3 + $0x150] sm:$0xff] %v436
          %445 = vst [vmem:[#allocation3 + $0x198] sm:$0xff] %v437
          %446 = vst [vmem:[#allocation3 + $0x1e0] sm:$0xff] %v438
          %447 = vst [vmem:[#allocation3 + $0x228] sm:$0xff] %v439
          %v448 = vld [vmem:[%s431 + $0x1] sm:$0xff]
          %v449 = vld [vmem:[%s431 + $0x11] sm:$0xff]
          %v450 = vld [vmem:[%s431 + $0x21] sm:$0xff]
          %v451 = vld [vmem:[%s431 + $0x31] sm:$0xff]
          %v452 = vld [vmem:[%s431 + $0x41] sm:$0xff]
          %v453 = vld [vmem:[%s431 + $0x51] sm:$0xff]
          %v454 = vld [vmem:[%s431 + $0x61] sm:$0xff]
          %v455 = vld [vmem:[%s431 + $0x71] sm:$0xff]
          %456 = vst [vmem:[#allocation3 + $0x38] sm:$0xff] %v448
          %457 = vst [vmem:[#allocation3 + $0x80] sm:$0xff] %v449
          %458 = vst [vmem:[#allocation3 + $0xc8] sm:$0xff] %v450
          %459 = vst [vmem:[#allocation3 + $0x110] sm:$0xff] %v451
          %460 = vst [vmem:[#allocation3 + $0x158] sm:$0xff] %v452
          %461 = vst [vmem:[#allocation3 + $0x1a0] sm:$0xff] %v453
          %462 = vst [vmem:[#allocation3 + $0x1e8] sm:$0xff] %v454
          %463 = vst [vmem:[#allocation3 + $0x230] sm:$0xff] %v455
          %v464 = vld [vmem:[%s431 + $0x2] sm:$0xff]
          %v465 = vld [vmem:[%s431 + $0x12] sm:$0xff]
          %v466 = vld [vmem:[%s431 + $0x22] sm:$0xff]
          %v467 = vld [vmem:[%s431 + $0x32] sm:$0xff]
          %v468 = vld [vmem:[%s431 + $0x42] sm:$0xff]
          %v469 = vld [vmem:[%s431 + $0x52] sm:$0xff]
          %v470 = vld [vmem:[%s431 + $0x62] sm:$0xff]
          %v471 = vld [vmem:[%s431 + $0x72] sm:$0xff]
          %472 = vst [vmem:[#allocation3 + $0x40] sm:$0xff] %v464
          %473 = vst [vmem:[#allocation3 + $0x88] sm:$0xff] %v465
          %474 = vst [vmem:[#allocation3 + $0xd0] sm:$0xff] %v466
          %475 = vst [vmem:[#allocation3 + $0x118] sm:$0xff] %v467
          %476 = vst [vmem:[#allocation3 + $0x160] sm:$0xff] %v468
          %477 = vst [vmem:[#allocation3 + $0x1a8] sm:$0xff] %v469
          %478 = vst [vmem:[#allocation3 + $0x1f0] sm:$0xff] %v470
          %479 = vst [vmem:[#allocation3 + $0x238] sm:$0xff] %v471
          %v480 = vld [vmem:[#allocation2] sm:$0xff]
          %v481 = vld [vmem:[#allocation2 + $0x8] sm:$0xff]
          %v482 = vld [vmem:[#allocation2 + $0x10] sm:$0xff]
          %v483 = vld [vmem:[#allocation2 + $0x18] sm:$0xff]
          %v484 = vld [vmem:[#allocation2 + $0x20] sm:$0xff]
          %v485 = vld [vmem:[#allocation2 + $0x28] sm:$0xff]
          %v486 = vld [vmem:[#allocation2 + $0x30] sm:$0xff]
          %v487 = vld [vmem:[#allocation2 + $0x38] sm:$0xff]
          %v488 = vld [vmem:[#allocation3] sm:$0xff]
          %v489 = vld [vmem:[#allocation3 + $0x8] sm:$0xff]
          %v490 = vld [vmem:[#allocation3 + $0x10] sm:$0xff]
          %v491 = vld [vmem:[#allocation3 + $0x18] sm:$0xff]
          %v492 = vld [vmem:[#allocation3 + $0x20] sm:$0xff]
          %v493 = vld [vmem:[#allocation3 + $0x28] sm:$0xff]
          %v494 = vld [vmem:[#allocation3 + $0x30] sm:$0xff]
          %v495 = vld [vmem:[#allocation3 + $0x38] sm:$0xff]
          %v496 = vld [vmem:[#allocation3 + $0x40] sm:$0xff]
          %v497 = vld [vmem:[#allocation3 + $0x48] sm:$0xff]
          %v498 = vld [vmem:[#allocation3 + $0x50] sm:$0xff]
          %v499 = vld [vmem:[#allocation3 + $0x58] sm:$0xff]
          %v500 = vld [vmem:[#allocation3 + $0x60] sm:$0xff]
          %v501 = vld [vmem:[#allocation3 + $0x68] sm:$0xff]
          %v502 = vld [vmem:[#allocation3 + $0x70] sm:$0xff]
          %v503 = vld [vmem:[#allocation3 + $0x78] sm:$0xff]
          %v504 = vld [vmem:[#allocation3 + $0x80] sm:$0xff]
          %v505 = vld [vmem:[#allocation3 + $0x88] sm:$0xff]
          %v506 = vld [vmem:[#allocation3 + $0x90] sm:$0xff]
          %v507 = vld [vmem:[#allocation3 + $0x98] sm:$0xff]
          %v508 = vld [vmem:[#allocation3 + $0xa0] sm:$0xff]
          %v509 = vld [vmem:[#allocation3 + $0xa8] sm:$0xff]
          %v510 = vld [vmem:[#allocation3 + $0xb0] sm:$0xff]
          %v511 = vld [vmem:[#allocation3 + $0xb8] sm:$0xff]
          %v512 = vld [vmem:[#allocation3 + $0xc0] sm:$0xff]
          %v513 = vld [vmem:[#allocation3 + $0xc8] sm:$0xff]
          %v514 = vld [vmem:[#allocation3 + $0xd0] sm:$0xff]
          %v515 = vld [vmem:[#allocation3 + $0xd8] sm:$0xff]
          %v516 = vld [vmem:[#allocation3 + $0xe0] sm:$0xff]
          %v517 = vld [vmem:[#allocation3 + $0xe8] sm:$0xff]
          %v518 = vld [vmem:[#allocation3 + $0xf0] sm:$0xff]
          %v519 = vld [vmem:[#allocation3 + $0xf8] sm:$0xff]
          %v520 = vld [vmem:[#allocation3 + $0x100] sm:$0xff]
          %v521 = vld [vmem:[#allocation3 + $0x108] sm:$0xff]
          %v522 = vld [vmem:[#allocation3 + $0x110] sm:$0xff]
          %v523 = vld [vmem:[#allocation3 + $0x118] sm:$0xff]
          %v524 = vld [vmem:[#allocation3 + $0x120] sm:$0xff]
          %v525 = vld [vmem:[#allocation3 + $0x128] sm:$0xff]
          %v526 = vld [vmem:[#allocation3 + $0x130] sm:$0xff]
          %v527 = vld [vmem:[#allocation3 + $0x138] sm:$0xff]
          %v528 = vld [vmem:[#allocation3 + $0x140] sm:$0xff]
          %v529 = vld [vmem:[#allocation3 + $0x148] sm:$0xff]
          %v530 = vld [vmem:[#allocation3 + $0x150] sm:$0xff]
          %v531 = vld [vmem:[#allocation3 + $0x158] sm:$0xff]
          %v532 = vld [vmem:[#allocation3 + $0x160] sm:$0xff]
          %v533 = vld [vmem:[#allocation3 + $0x168] sm:$0xff]
          %v534 = vld [vmem:[#allocation3 + $0x170] sm:$0xff]
          %v535 = vld [vmem:[#allocation3 + $0x178] sm:$0xff]
          %v536 = vld [vmem:[#allocation3 + $0x180] sm:$0xff]
          %v537 = vld [vmem:[#allocation3 + $0x188] sm:$0xff]
          %v538 = vld [vmem:[#allocation3 + $0x190] sm:$0xff]
          %v539 = vld [vmem:[#allocation3 + $0x198] sm:$0xff]
          %v540 = vld [vmem:[#allocation3 + $0x1a0] sm:$0xff]
          %v541 = vld [vmem:[#allocation3 + $0x1a8] sm:$0xff]
          %v542 = vld [vmem:[#allocation3 + $0x1b0] sm:$0xff]
          %v543 = vld [vmem:[#allocation3 + $0x1b8] sm:$0xff]
          %v544 = vld [vmem:[#allocation3 + $0x1c0] sm:$0xff]
          %v545 = vld [vmem:[#allocation3 + $0x1c8] sm:$0xff]
          %v546 = vld [vmem:[#allocation3 + $0x1d0] sm:$0xff]
          %v547 = vld [vmem:[#allocation3 + $0x1d8] sm:$0xff]
          %v548 = vld [vmem:[#allocation3 + $0x1e0] sm:$0xff]
          %v549 = vld [vmem:[#allocation3 + $0x1e8] sm:$0xff]
          %v550 = vld [vmem:[#allocation3 + $0x1f0] sm:$0xff]
          %v551 = vld [vmem:[#allocation3 + $0x1f8] sm:$0xff]
          %v552 = vld [vmem:[#allocation3 + $0x200] sm:$0xff]
          %v553 = vld [vmem:[#allocation3 + $0x208] sm:$0xff]
          %v554 = vld [vmem:[#allocation3 + $0x210] sm:$0xff]
          %v555 = vld [vmem:[#allocation3 + $0x218] sm:$0xff]
          %v556 = vld [vmem:[#allocation3 + $0x220] sm:$0xff]
          %v557 = vld [vmem:[#allocation3 + $0x228] sm:$0xff]
          %v558 = vld [vmem:[#allocation3 + $0x230] sm:$0xff]
          %v559 = vld [vmem:[#allocation3 + $0x238] sm:$0xff]
          %v560 = vld [vmem:[%s252] sm:$0xff]
          %v561 = vld [vmem:[%s252 + $0x8] sm:$0xff]
          %v562 = vld [vmem:[%s252 + $0x10] sm:$0xff]
          %v563 = vld [vmem:[%s252 + $0x18] sm:$0xff]
          %v564 = vld [vmem:[%s252 + $0x20] sm:$0xff]
          %v565 = vld [vmem:[%s252 + $0x28] sm:$0xff]
          %v566 = vld [vmem:[%s252 + $0x30] sm:$0xff]
          %v567 = vld [vmem:[%s252 + $0x38] sm:$0xff]
          %v568 = vld [vmem:[%s252 + $0x40] sm:$0xff]
          %v569 = vld [vmem:[%s252 + $0x48] sm:$0xff]
          %v570 = vld [vmem:[%s252 + $0x50] sm:$0xff]
          %v571 = vld [vmem:[%s252 + $0x58] sm:$0xff]
          %v572 = vld [vmem:[%s252 + $0x60] sm:$0xff]
          %v573 = vld [vmem:[%s252 + $0x68] sm:$0xff]
          %v574 = vld [vmem:[%s252 + $0x70] sm:$0xff]
          %v575 = vld [vmem:[%s252 + $0x78] sm:$0xff]
          %v576 = vld [vmem:[%s252 + $0x80] sm:$0xff]
          %v577 = vld [vmem:[%s252 + $0x88] sm:$0xff]
          %v578 = vld [vmem:[%s252 + $0x90] sm:$0xff]
          %v579 = vld [vmem:[%s252 + $0x98] sm:$0xff]
          %v580 = vld [vmem:[%s252 + $0xa0] sm:$0xff]
          %v581 = vld [vmem:[%s252 + $0xa8] sm:$0xff]
          %v582 = vld [vmem:[%s252 + $0xb0] sm:$0xff]
          %v583 = vld [vmem:[%s252 + $0xb8] sm:$0xff]
          %v584 = vld [vmem:[%s252 + $0xc0] sm:$0xff]
          %v585 = vld [vmem:[%s252 + $0xc8] sm:$0xff]
          %v586 = vld [vmem:[%s252 + $0xd0] sm:$0xff]
          %v587 = vld [vmem:[%s252 + $0xd8] sm:$0xff]
          %v588 = vld [vmem:[%s252 + $0xe0] sm:$0xff]
          %v589 = vld [vmem:[%s252 + $0xe8] sm:$0xff]
          %v590 = vld [vmem:[%s252 + $0xf0] sm:$0xff]
          %v591 = vld [vmem:[%s252 + $0xf8] sm:$0xff]
          %v592 = vld [vmem:[%s252 + $0x100] sm:$0xff]
          %v593 = vld [vmem:[%s252 + $0x108] sm:$0xff]
          %v594 = vld [vmem:[%s252 + $0x110] sm:$0xff]
          %v595 = vld [vmem:[%s252 + $0x118] sm:$0xff]
          %v596 = vld [vmem:[%s252 + $0x120] sm:$0xff]
          %v597 = vld [vmem:[%s252 + $0x128] sm:$0xff]
          %v598 = vld [vmem:[%s252 + $0x130] sm:$0xff]
          %v599 = vld [vmem:[%s252 + $0x138] sm:$0xff]
          %v600 = vld [vmem:[%s252 + $0x140] sm:$0xff]
          %v601 = vld [vmem:[%s252 + $0x148] sm:$0xff]
          %v602 = vld [vmem:[%s252 + $0x150] sm:$0xff]
          %v603 = vld [vmem:[%s252 + $0x158] sm:$0xff]
          %v604 = vld [vmem:[%s252 + $0x160] sm:$0xff]
          %v605 = vld [vmem:[%s252 + $0x168] sm:$0xff]
          %v606 = vld [vmem:[%s252 + $0x170] sm:$0xff]
          %v607 = vld [vmem:[%s252 + $0x178] sm:$0xff]
          %v608 = vld [vmem:[%s252 + $0x180] sm:$0xff]
          %v609 = vld [vmem:[%s252 + $0x188] sm:$0xff]
          %v610 = vld [vmem:[%s252 + $0x190] sm:$0xff]
          %v611 = vld [vmem:[%s252 + $0x198] sm:$0xff]
          %v612 = vld [vmem:[%s252 + $0x1a0] sm:$0xff]
          %v613 = vld [vmem:[%s252 + $0x1a8] sm:$0xff]
          %v614 = vld [vmem:[%s252 + $0x1b0] sm:$0xff]
          %v615 = vld [vmem:[%s252 + $0x1b8] sm:$0xff]
          %v616 = vld [vmem:[%s252 + $0x1c0] sm:$0xff]
          %v617 = vld [vmem:[%s252 + $0x1c8] sm:$0xff]
          %v618 = vld [vmem:[%s252 + $0x1d0] sm:$0xff]
          %v619 = vld [vmem:[%s252 + $0x1d8] sm:$0xff]
          %v620 = vld [vmem:[%s252 + $0x1e0] sm:$0xff]
          %v621 = vld [vmem:[%s252 + $0x1e8] sm:$0xff]
          %v622 = vld [vmem:[%s252 + $0x1f0] sm:$0xff]
          %v623 = vld [vmem:[%s252 + $0x1f8] sm:$0xff]
          %v624 = vld [vmem:[%s252 + $0x200] sm:$0xff]
          %v625 = vld [vmem:[%s252 + $0x208] sm:$0xff]
          %v626 = vld [vmem:[%s252 + $0x210] sm:$0xff]
          %v627 = vld [vmem:[%s252 + $0x218] sm:$0xff]
          %v628 = vld [vmem:[%s252 + $0x220] sm:$0xff]
          %v629 = vld [vmem:[%s252 + $0x228] sm:$0xff]
          %v630 = vld [vmem:[%s252 + $0x230] sm:$0xff]
          %v631 = vld [vmem:[%s252 + $0x238] sm:$0xff]
          %v632 = vld [vmem:[%s252 + $0x240] sm:$0xff]
          %v633 = vld [vmem:[%s252 + $0x248] sm:$0xff]
          %v634 = vld [vmem:[%s252 + $0x250] sm:$0xff]
          %v635 = vld [vmem:[%s252 + $0x258] sm:$0xff]
          %v636 = vld [vmem:[%s252 + $0x260] sm:$0xff]
          %v637 = vld [vmem:[%s252 + $0x268] sm:$0xff]
          %v638 = vld [vmem:[%s252 + $0x270] sm:$0xff]
          %v639 = vld [vmem:[%s252 + $0x278] sm:$0xff]
          %v640 = vld [vmem:[%s252 + $0x280] sm:$0xff]
          %v641 = vld [vmem:[%s252 + $0x288] sm:$0xff]
          %v642 = vld [vmem:[%s252 + $0x290] sm:$0xff]
          %v643 = vld [vmem:[%s252 + $0x298] sm:$0xff]
          %v644 = vld [vmem:[%s252 + $0x2a0] sm:$0xff]
          %v645 = vld [vmem:[%s252 + $0x2a8] sm:$0xff]
          %v646 = vld [vmem:[%s252 + $0x2b0] sm:$0xff]
          %v647 = vld [vmem:[%s252 + $0x2b8] sm:$0xff]
          %v648 = vld [vmem:[%s252 + $0x2c0] sm:$0xff]
          %v649 = vld [vmem:[%s252 + $0x2c8] sm:$0xff]
          %v650 = vld [vmem:[%s252 + $0x2d0] sm:$0xff]
          %v651 = vld [vmem:[%s252 + $0x2d8] sm:$0xff]
          %v652 = vld [vmem:[%s252 + $0x2e0] sm:$0xff]
          %v653 = vld [vmem:[%s252 + $0x2e8] sm:$0xff]
          %v654 = vld [vmem:[%s252 + $0x2f0] sm:$0xff]
          %v655 = vld [vmem:[%s252 + $0x2f8] sm:$0xff]
          %v656 = vld [vmem:[%s252 + $0x300] sm:$0xff]
          %v657 = vld [vmem:[%s252 + $0x308] sm:$0xff]
          %v658 = vld [vmem:[%s252 + $0x310] sm:$0xff]
          %v659 = vld [vmem:[%s252 + $0x318] sm:$0xff]
          %v660 = vld [vmem:[%s252 + $0x320] sm:$0xff]
          %v661 = vld [vmem:[%s252 + $0x328] sm:$0xff]
          %v662 = vld [vmem:[%s252 + $0x330] sm:$0xff]
          %v663 = vld [vmem:[%s252 + $0x338] sm:$0xff]
          %v664 = vld [vmem:[%s252 + $0x340] sm:$0xff]
          %v665 = vld [vmem:[%s252 + $0x348] sm:$0xff]
          %v666 = vld [vmem:[%s252 + $0x350] sm:$0xff]
          %v667 = vld [vmem:[%s252 + $0x358] sm:$0xff]
          %v668 = vld [vmem:[%s252 + $0x360] sm:$0xff]
          %v669 = vld [vmem:[%s252 + $0x368] sm:$0xff]
          %v670 = vld [vmem:[%s252 + $0x370] sm:$0xff]
          %v671 = vld [vmem:[%s252 + $0x378] sm:$0xff]
          %v672 = vld [vmem:[%s252 + $0x380] sm:$0xff]
          %v673 = vld [vmem:[%s252 + $0x388] sm:$0xff]
          %v674 = vld [vmem:[%s252 + $0x390] sm:$0xff]
          %v675 = vld [vmem:[%s252 + $0x398] sm:$0xff]
          %v676 = vld [vmem:[%s252 + $0x3a0] sm:$0xff]
          %v677 = vld [vmem:[%s252 + $0x3a8] sm:$0xff]
          %v678 = vld [vmem:[%s252 + $0x3b0] sm:$0xff]
          %v679 = vld [vmem:[%s252 + $0x3b8] sm:$0xff]
          %v680 = vld [vmem:[%s252 + $0x3c0] sm:$0xff]
          %v681 = vld [vmem:[%s252 + $0x3c8] sm:$0xff]
          %v682 = vld [vmem:[%s252 + $0x3d0] sm:$0xff]
          %v683 = vld [vmem:[%s252 + $0x3d8] sm:$0xff]
          %v684 = vld [vmem:[%s252 + $0x3e0] sm:$0xff]
          %v685 = vld [vmem:[%s252 + $0x3e8] sm:$0xff]
          %v686 = vld [vmem:[%s252 + $0x3f0] sm:$0xff]
          %v687 = vld [vmem:[%s252 + $0x3f8] sm:$0xff]
          %v688 = vld [vmem:[%s252 + $0x400] sm:$0xff]
          %v689 = vld [vmem:[%s252 + $0x408] sm:$0xff]
          %v690 = vld [vmem:[%s252 + $0x410] sm:$0xff]
          %v691 = vld [vmem:[%s252 + $0x418] sm:$0xff]
          %v692 = vld [vmem:[%s252 + $0x420] sm:$0xff]
          %v693 = vld [vmem:[%s252 + $0x428] sm:$0xff]
          %v694 = vld [vmem:[%s252 + $0x430] sm:$0xff]
          %v695 = vld [vmem:[%s252 + $0x438] sm:$0xff]
          %v696 = vld [vmem:[%s252 + $0x440] sm:$0xff]
          %v697 = vld [vmem:[%s252 + $0x448] sm:$0xff]
          %v698 = vld [vmem:[%s252 + $0x450] sm:$0xff]
          %v699 = vld [vmem:[%s252 + $0x458] sm:$0xff]
          %v700 = vld [vmem:[%s252 + $0x460] sm:$0xff]
          %v701 = vld [vmem:[%s252 + $0x468] sm:$0xff]
          %v702 = vld [vmem:[%s252 + $0x470] sm:$0xff]
          %v703 = vld [vmem:[%s252 + $0x478] sm:$0xff]
          %704 = vmatpush.msra.mxu0 %v575
          %705 = vmatpush.msra.mxu0 %v574
          %706 = vmatpush.msra.mxu0 %v573
          %707 = vmatpush.msra.mxu0 %v572
          %708 = vmatpush.msra.mxu0 %v571
          %709 = vmatpush.msra.mxu0 %v570
          %710 = vmatpush.msra.mxu0 %v569
          %711 = vmatpush.msra.mxu0 %v568
          %712 = vmatpush.msra.mxu0 %v567
          %713 = vmatpush.msra.mxu0 %v566
          %714 = vmatpush.msra.mxu0 %v565
          %715 = vmatpush.msra.mxu0 %v564
          %716 = vmatpush.msra.mxu0 %v563
          %717 = vmatpush.msra.mxu0 %v562
          %718 = vmatpush.msra.mxu0 %v561
          %719 = vmatpush.msra.mxu0 %v560
          %720 = vmatmul.f32.gmra.mxu0 %v488
          %v721 = vpop.f32.mrf.mxu0
          %v722 = vadd.f32 0.0, %v721
          %723 = vmatmul.f32.gmra.mxu0 %v497
          %v724 = vpop.f32.mrf.mxu0
          %v725 = vadd.f32 0.0, %v724
          %726 = vmatmul.f32.gmra.mxu0 %v506
          %v727 = vpop.f32.mrf.mxu0
          %v728 = vadd.f32 0.0, %v727
          %729 = vmatmul.f32.gmra.mxu0 %v515
          %v730 = vpop.f32.mrf.mxu0
          %v731 = vadd.f32 0.0, %v730
          %732 = vmatmul.f32.gmra.mxu0 %v524
          %v733 = vpop.f32.mrf.mxu0
          %v734 = vadd.f32 0.0, %v733
          %735 = vmatmul.f32.gmra.mxu0 %v533
          %v736 = vpop.f32.mrf.mxu0
          %v737 = vadd.f32 0.0, %v736
          %738 = vmatmul.f32.gmra.mxu0 %v542
          %v739 = vpop.f32.mrf.mxu0
          %v740 = vadd.f32 0.0, %v739
          %741 = vmatmul.f32.gmra.mxu0 %v551
          %v742 = vpop.f32.mrf.mxu0
          %v743 = vadd.f32 0.0, %v742
          %744 = vdwg.mxu0
          %745 = vmatpush.msra.mxu0 %v591
          %746 = vmatpush.msra.mxu0 %v590
          %747 = vmatpush.msra.mxu0 %v589
          %748 = vmatpush.msra.mxu0 %v588
          %749 = vmatpush.msra.mxu0 %v587
          %750 = vmatpush.msra.mxu0 %v586
          %751 = vmatpush.msra.mxu0 %v585
          %752 = vmatpush.msra.mxu0 %v584
          %753 = vmatpush.msra.mxu0 %v583
          %754 = vmatpush.msra.mxu0 %v582
          %755 = vmatpush.msra.mxu0 %v581
          %756 = vmatpush.msra.mxu0 %v580
          %757 = vmatpush.msra.mxu0 %v579
          %758 = vmatpush.msra.mxu0 %v578
          %759 = vmatpush.msra.mxu0 %v577
          %760 = vmatpush.msra.mxu0 %v576
          %761 = vmatmul.f32.gmra.mxu0 %v489
          %v762 = vpop.f32.mrf.mxu0
          %v763 = vadd.f32 %v722, %v762
          %764 = vmatmul.f32.gmra.mxu0 %v498
          %v765 = vpop.f32.mrf.mxu0
          %v766 = vadd.f32 %v725, %v765
          %767 = vmatmul.f32.gmra.mxu0 %v507
          %v768 = vpop.f32.mrf.mxu0
          %v769 = vadd.f32 %v728, %v768
          %770 = vmatmul.f32.gmra.mxu0 %v516
          %v771 = vpop.f32.mrf.mxu0
          %v772 = vadd.f32 %v731, %v771
          %773 = vmatmul.f32.gmra.mxu0 %v525
          %v774 = vpop.f32.mrf.mxu0
          %v775 = vadd.f32 %v734, %v774
          %776 = vmatmul.f32.gmra.mxu0 %v534
          %v777 = vpop.f32.mrf.mxu0
          %v778 = vadd.f32 %v737, %v777
          %779 = vmatmul.f32.gmra.mxu0 %v543
          %v780 = vpop.f32.mrf.mxu0
          %v781 = vadd.f32 %v740, %v780
          %782 = vmatmul.f32.gmra.mxu0 %v552
          %v783 = vpop.f32.mrf.mxu0
          %v784 = vadd.f32 %v743, %v783
          %785 = vdwg.mxu0
          %786 = vmatpush.msra.mxu0 %v607
          %787 = vmatpush.msra.mxu0 %v606
          %788 = vmatpush.msra.mxu0 %v605
          %789 = vmatpush.msra.mxu0 %v604
          %790 = vmatpush.msra.mxu0 %v603
          %791 = vmatpush.msra.mxu0 %v602
          %792 = vmatpush.msra.mxu0 %v601
          %793 = vmatpush.msra.mxu0 %v600
          %794 = vmatpush.msra.mxu0 %v599
          %795 = vmatpush.msra.mxu0 %v598
          %796 = vmatpush.msra.mxu0 %v597
          %797 = vmatpush.msra.mxu0 %v596
          %798 = vmatpush.msra.mxu0 %v595
          %799 = vmatpush.msra.mxu0 %v594
          %800 = vmatpush.msra.mxu0 %v593
          %801 = vmatpush.msra.mxu0 %v592
          %802 = vmatmul.f32.gmra.mxu0 %v490
          %v803 = vpop.f32.mrf.mxu0
          %v804 = vadd.f32 %v763, %v803
          %805 = vmatmul.f32.gmra.mxu0 %v499
          %v806 = vpop.f32.mrf.mxu0
          %v807 = vadd.f32 %v766, %v806
          %808 = vmatmul.f32.gmra.mxu0 %v508
          %v809 = vpop.f32.mrf.mxu0
          %v810 = vadd.f32 %v769, %v809
          %811 = vmatmul.f32.gmra.mxu0 %v517
          %v812 = vpop.f32.mrf.mxu0
          %v813 = vadd.f32 %v772, %v812
          %814 = vmatmul.f32.gmra.mxu0 %v526
          %v815 = vpop.f32.mrf.mxu0
          %v816 = vadd.f32 %v775, %v815
          %817 = vmatmul.f32.gmra.mxu0 %v535
          %v818 = vpop.f32.mrf.mxu0
          %v819 = vadd.f32 %v778, %v818
          %820 = vmatmul.f32.gmra.mxu0 %v544
          %v821 = vpop.f32.mrf.mxu0
          %v822 = vadd.f32 %v781, %v821
          %823 = vmatmul.f32.gmra.mxu0 %v553
          %v824 = vpop.f32.mrf.mxu0
          %v825 = vadd.f32 %v784, %v824
          %826 = vdwg.mxu0
          %827 = vmatpush.msra.mxu0 %v623
          %828 = vmatpush.msra.mxu0 %v622
          %829 = vmatpush.msra.mxu0 %v621
          %830 = vmatpush.msra.mxu0 %v620
          %831 = vmatpush.msra.mxu0 %v619
          %832 = vmatpush.msra.mxu0 %v618
          %833 = vmatpush.msra.mxu0 %v617
          %834 = vmatpush.msra.mxu0 %v616
          %835 = vmatpush.msra.mxu0 %v615
          %836 = vmatpush.msra.mxu0 %v614
          %837 = vmatpush.msra.mxu0 %v613
          %838 = vmatpush.msra.mxu0 %v612
          %839 = vmatpush.msra.mxu0 %v611
          %840 = vmatpush.msra.mxu0 %v610
          %841 = vmatpush.msra.mxu0 %v609
          %842 = vmatpush.msra.mxu0 %v608
          %843 = vmatmul.f32.gmra.mxu0 %v491
          %v844 = vpop.f32.mrf.mxu0
          %v845 = vadd.f32 %v804, %v844
          %846 = vmatmul.f32.gmra.mxu0 %v500
          %v847 = vpop.f32.mrf.mxu0
          %v848 = vadd.f32 %v807, %v847
          %849 = vmatmul.f32.gmra.mxu0 %v509
          %v850 = vpop.f32.mrf.mxu0
          %v851 = vadd.f32 %v810, %v850
          %852 = vmatmul.f32.gmra.mxu0 %v518
          %v853 = vpop.f32.mrf.mxu0
          %v854 = vadd.f32 %v813, %v853
          %855 = vmatmul.f32.gmra.mxu0 %v527
          %v856 = vpop.f32.mrf.mxu0
          %v857 = vadd.f32 %v816, %v856
          %858 = vmatmul.f32.gmra.mxu0 %v536
          %v859 = vpop.f32.mrf.mxu0
          %v860 = vadd.f32 %v819, %v859
          %861 = vmatmul.f32.gmra.mxu0 %v545
          %v862 = vpop.f32.mrf.mxu0
          %v863 = vadd.f32 %v822, %v862
          %864 = vmatmul.f32.gmra.mxu0 %v554
          %v865 = vpop.f32.mrf.mxu0
          %v866 = vadd.f32 %v825, %v865
          %867 = vdwg.mxu0
          %868 = vmatpush.msra.mxu0 %v639
          %869 = vmatpush.msra.mxu0 %v638
          %870 = vmatpush.msra.mxu0 %v637
          %871 = vmatpush.msra.mxu0 %v636
          %872 = vmatpush.msra.mxu0 %v635
          %873 = vmatpush.msra.mxu0 %v634
          %874 = vmatpush.msra.mxu0 %v633
          %875 = vmatpush.msra.mxu0 %v632
          %876 = vmatpush.msra.mxu0 %v631
          %877 = vmatpush.msra.mxu0 %v630
          %878 = vmatpush.msra.mxu0 %v629
          %879 = vmatpush.msra.mxu0 %v628
          %880 = vmatpush.msra.mxu0 %v627
          %881 = vmatpush.msra.mxu0 %v626
          %882 = vmatpush.msra.mxu0 %v625
          %883 = vmatpush.msra.mxu0 %v624
          %884 = vmatmul.f32.gmra.mxu0 %v492
          %v885 = vpop.f32.mrf.mxu0
          %v886 = vadd.f32 %v845, %v885
          %887 = vmatmul.f32.gmra.mxu0 %v501
          %v888 = vpop.f32.mrf.mxu0
          %v889 = vadd.f32 %v848, %v888
          %890 = vmatmul.f32.gmra.mxu0 %v510
          %v891 = vpop.f32.mrf.mxu0
          %v892 = vadd.f32 %v851, %v891
          %893 = vmatmul.f32.gmra.mxu0 %v519
          %v894 = vpop.f32.mrf.mxu0
          %v895 = vadd.f32 %v854, %v894
          %896 = vmatmul.f32.gmra.mxu0 %v528
          %v897 = vpop.f32.mrf.mxu0
          %v898 = vadd.f32 %v857, %v897
          %899 = vmatmul.f32.gmra.mxu0 %v537
          %v900 = vpop.f32.mrf.mxu0
          %v901 = vadd.f32 %v860, %v900
          %902 = vmatmul.f32.gmra.mxu0 %v546
          %v903 = vpop.f32.mrf.mxu0
          %v904 = vadd.f32 %v863, %v903
          %905 = vmatmul.f32.gmra.mxu0 %v555
          %v906 = vpop.f32.mrf.mxu0
          %v907 = vadd.f32 %v866, %v906
          %908 = vdwg.mxu0
          %909 = vmatpush.msra.mxu0 %v655
          %910 = vmatpush.msra.mxu0 %v654
          %911 = vmatpush.msra.mxu0 %v653
          %912 = vmatpush.msra.mxu0 %v652
          %913 = vmatpush.msra.mxu0 %v651
          %914 = vmatpush.msra.mxu0 %v650
          %915 = vmatpush.msra.mxu0 %v649
          %916 = vmatpush.msra.mxu0 %v648
          %917 = vmatpush.msra.mxu0 %v647
          %918 = vmatpush.msra.mxu0 %v646
          %919 = vmatpush.msra.mxu0 %v645
          %920 = vmatpush.msra.mxu0 %v644
          %921 = vmatpush.msra.mxu0 %v643
          %922 = vmatpush.msra.mxu0 %v642
          %923 = vmatpush.msra.mxu0 %v641
          %924 = vmatpush.msra.mxu0 %v640
          %925 = vmatmul.f32.gmra.mxu0 %v493
          %v926 = vpop.f32.mrf.mxu0
          %v927 = vadd.f32 %v886, %v926
          %928 = vmatmul.f32.gmra.mxu0 %v502
          %v929 = vpop.f32.mrf.mxu0
          %v930 = vadd.f32 %v889, %v929
          %931 = vmatmul.f32.gmra.mxu0 %v511
          %v932 = vpop.f32.mrf.mxu0
          %v933 = vadd.f32 %v892, %v932
          %934 = vmatmul.f32.gmra.mxu0 %v520
          %v935 = vpop.f32.mrf.mxu0
          %v936 = vadd.f32 %v895, %v935
          %937 = vmatmul.f32.gmra.mxu0 %v529
          %v938 = vpop.f32.mrf.mxu0
          %v939 = vadd.f32 %v898, %v938
          %940 = vmatmul.f32.gmra.mxu0 %v538
          %v941 = vpop.f32.mrf.mxu0
          %v942 = vadd.f32 %v901, %v941
          %943 = vmatmul.f32.gmra.mxu0 %v547
          %v944 = vpop.f32.mrf.mxu0
          %v945 = vadd.f32 %v904, %v944
          %946 = vmatmul.f32.gmra.mxu0 %v556
          %v947 = vpop.f32.mrf.mxu0
          %v948 = vadd.f32 %v907, %v947
          %949 = vdwg.mxu0
          %950 = vmatpush.msra.mxu0 %v671
          %951 = vmatpush.msra.mxu0 %v670
          %952 = vmatpush.msra.mxu0 %v669
          %953 = vmatpush.msra.mxu0 %v668
          %954 = vmatpush.msra.mxu0 %v667
          %955 = vmatpush.msra.mxu0 %v666
          %956 = vmatpush.msra.mxu0 %v665
          %957 = vmatpush.msra.mxu0 %v664
          %958 = vmatpush.msra.mxu0 %v663
          %959 = vmatpush.msra.mxu0 %v662
          %960 = vmatpush.msra.mxu0 %v661
          %961 = vmatpush.msra.mxu0 %v660
          %962 = vmatpush.msra.mxu0 %v659
          %963 = vmatpush.msra.mxu0 %v658
          %964 = vmatpush.msra.mxu0 %v657
          %965 = vmatpush.msra.mxu0 %v656
          %966 = vmatmul.f32.gmra.mxu0 %v494
          %v967 = vpop.f32.mrf.mxu0
          %v968 = vadd.f32 %v927, %v967
          %969 = vmatmul.f32.gmra.mxu0 %v503
          %v970 = vpop.f32.mrf.mxu0
          %v971 = vadd.f32 %v930, %v970
          %972 = vmatmul.f32.gmra.mxu0 %v512
          %v973 = vpop.f32.mrf.mxu0
          %v974 = vadd.f32 %v933, %v973
          %975 = vmatmul.f32.gmra.mxu0 %v521
          %v976 = vpop.f32.mrf.mxu0
          %v977 = vadd.f32 %v936, %v976
          %978 = vmatmul.f32.gmra.mxu0 %v530
          %v979 = vpop.f32.mrf.mxu0
          %v980 = vadd.f32 %v939, %v979
          %981 = vmatmul.f32.gmra.mxu0 %v539
          %v982 = vpop.f32.mrf.mxu0
          %v983 = vadd.f32 %v942, %v982
          %984 = vmatmul.f32.gmra.mxu0 %v548
          %v985 = vpop.f32.mrf.mxu0
          %v986 = vadd.f32 %v945, %v985
          %987 = vmatmul.f32.gmra.mxu0 %v557
          %v988 = vpop.f32.mrf.mxu0
          %v989 = vadd.f32 %v948, %v988
          %990 = vdwg.mxu0
          %991 = vmatpush.msra.mxu0 %v687
          %992 = vmatpush.msra.mxu0 %v686
          %993 = vmatpush.msra.mxu0 %v685
          %994 = vmatpush.msra.mxu0 %v684
          %995 = vmatpush.msra.mxu0 %v683
          %996 = vmatpush.msra.mxu0 %v682
          %997 = vmatpush.msra.mxu0 %v681
          %998 = vmatpush.msra.mxu0 %v680
          %999 = vmatpush.msra.mxu0 %v679
          %1000 = vmatpush.msra.mxu0 %v678
          %1001 = vmatpush.msra.mxu0 %v677
          %1002 = vmatpush.msra.mxu0 %v676
          %1003 = vmatpush.msra.mxu0 %v675
          %1004 = vmatpush.msra.mxu0 %v674
          %1005 = vmatpush.msra.mxu0 %v673
          %1006 = vmatpush.msra.mxu0 %v672
          %1007 = vmatmul.f32.gmra.mxu0 %v495
          %v1008 = vpop.f32.mrf.mxu0
          %v1009 = vadd.f32 %v968, %v1008
          %1010 = vmatmul.f32.gmra.mxu0 %v504
          %v1011 = vpop.f32.mrf.mxu0
          %v1012 = vadd.f32 %v971, %v1011
          %1013 = vmatmul.f32.gmra.mxu0 %v513
          %v1014 = vpop.f32.mrf.mxu0
          %v1015 = vadd.f32 %v974, %v1014
          %1016 = vmatmul.f32.gmra.mxu0 %v522
          %v1017 = vpop.f32.mrf.mxu0
          %v1018 = vadd.f32 %v977, %v1017
          %1019 = vmatmul.f32.gmra.mxu0 %v531
          %v1020 = vpop.f32.mrf.mxu0
          %v1021 = vadd.f32 %v980, %v1020
          %1022 = vmatmul.f32.gmra.mxu0 %v540
          %v1023 = vpop.f32.mrf.mxu0
          %v1024 = vadd.f32 %v983, %v1023
          %1025 = vmatmul.f32.gmra.mxu0 %v549
          %v1026 = vpop.f32.mrf.mxu0
          %v1027 = vadd.f32 %v986, %v1026
          %1028 = vmatmul.f32.gmra.mxu0 %v558
          %v1029 = vpop.f32.mrf.mxu0
          %v1030 = vadd.f32 %v989, %v1029
          %1031 = vdwg.mxu0
          %1032 = vmatpush.msra.mxu0 %v703
          %1033 = vmatpush.msra.mxu0 %v702
          %1034 = vmatpush.msra.mxu0 %v701
          %1035 = vmatpush.msra.mxu0 %v700
          %1036 = vmatpush.msra.mxu0 %v699
          %1037 = vmatpush.msra.mxu0 %v698
          %1038 = vmatpush.msra.mxu0 %v697
          %1039 = vmatpush.msra.mxu0 %v696
          %1040 = vmatpush.msra.mxu0 %v695
          %1041 = vmatpush.msra.mxu0 %v694
          %1042 = vmatpush.msra.mxu0 %v693
          %1043 = vmatpush.msra.mxu0 %v692
          %1044 = vmatpush.msra.mxu0 %v691
          %1045 = vmatpush.msra.mxu0 %v690
          %1046 = vmatpush.msra.mxu0 %v689
          %1047 = vmatpush.msra.mxu0 %v688
          %1048 = vmatmul.f32.gmra.mxu0 %v496
          %v1049 = vpop.f32.mrf.mxu0
          %v1050 = vadd.f32 %v1009, %v1049
          %1051 = vmatmul.f32.gmra.mxu0 %v505
          %v1052 = vpop.f32.mrf.mxu0
          %v1053 = vadd.f32 %v1012, %v1052
          %1054 = vmatmul.f32.gmra.mxu0 %v514
          %v1055 = vpop.f32.mrf.mxu0
          %v1056 = vadd.f32 %v1015, %v1055
          %1057 = vmatmul.f32.gmra.mxu0 %v523
          %v1058 = vpop.f32.mrf.mxu0
          %v1059 = vadd.f32 %v1018, %v1058
          %1060 = vmatmul.f32.gmra.mxu0 %v532
          %v1061 = vpop.f32.mrf.mxu0
          %v1062 = vadd.f32 %v1021, %v1061
          %1063 = vmatmul.f32.gmra.mxu0 %v541
          %v1064 = vpop.f32.mrf.mxu0
          %v1065 = vadd.f32 %v1024, %v1064
          %1066 = vmatmul.f32.gmra.mxu0 %v550
          %v1067 = vpop.f32.mrf.mxu0
          %v1068 = vadd.f32 %v1027, %v1067
          %1069 = vmatmul.f32.gmra.mxu0 %v559
          %v1070 = vpop.f32.mrf.mxu0
          %v1071 = vadd.f32 %v1030, %v1070
          %1072 = vdwg.mxu0
          %v1073 = vadd.f32 %v480, %v1050
          %v1074 = vadd.f32 %v481, %v1053
          %v1075 = vadd.f32 %v482, %v1056
          %v1076 = vadd.f32 %v483, %v1059
          %v1077 = vadd.f32 %v484, %v1062
          %v1078 = vadd.f32 %v485, %v1065
          %v1079 = vadd.f32 %v486, %v1068
          %v1080 = vadd.f32 %v487, %v1071
          %1081 = vst [vmem:[#allocation2] sm:$0xff] %v1073
          %1082 = vst [vmem:[#allocation2 + $0x8] sm:$0xff] %v1074
          %1083 = vst [vmem:[#allocation2 + $0x10] sm:$0xff] %v1075
          %1084 = vst [vmem:[#allocation2 + $0x18] sm:$0xff] %v1076
          %1085 = vst [vmem:[#allocation2 + $0x20] sm:$0xff] %v1077
          %1086 = vst [vmem:[#allocation2 + $0x28] sm:$0xff] %v1078
          %1087 = vst [vmem:[#allocation2 + $0x30] sm:$0xff] %v1079
          %1088 = vst [vmem:[#allocation2 + $0x38] sm:$0xff] %v1080
        $region44: #{tpu_custom_call.1} parent=31 // pred_fallthru
          _
        %p1089 = scmp.eq.s32.totalorder %s40, 11
        // Predicated region
        $region45: #{tpu_custom_call.1} parent=31 // pred_check
          %p1090 = pneg %p1089
        $region46: #{tpu_custom_call.1} parent=31 // pred_check_branch
          %1092 = sbr.rel (%p1090) target = $region48
        $region47: #{tpu_custom_call.1} parent=31 // pred_region
          %v1093 = vld [vmem:[#allocation2] sm:$0xff]
          %v1094 = vld [vmem:[#allocation2 + $0x8] sm:$0xff]
          %v1095 = vld [vmem:[#allocation2 + $0x10] sm:$0xff]
          %v1096 = vld [vmem:[#allocation2 + $0x18] sm:$0xff]
          %v1097 = vld [vmem:[#allocation2 + $0x20] sm:$0xff]
          %v1098 = vld [vmem:[#allocation2 + $0x28] sm:$0xff]
          %v1099 = vld [vmem:[#allocation2 + $0x30] sm:$0xff]
          %v1100 = vld [vmem:[#allocation2 + $0x38] sm:$0xff]
          %1101 = vst [vmem:[%s292] sm:$0xff] %v1093
          %1102 = vst [vmem:[%s292 + $0x8] sm:$0xff] %v1094
          %1103 = vst [vmem:[%s292 + $0x10] sm:$0xff] %v1095
          %1104 = vst [vmem:[%s292 + $0x18] sm:$0xff] %v1096
          %1105 = vst [vmem:[%s292 + $0x20] sm:$0xff] %v1097
          %1106 = vst [vmem:[%s292 + $0x28] sm:$0xff] %v1098
          %1107 = vst [vmem:[%s292 + $0x30] sm:$0xff] %v1099
          %1108 = vst [vmem:[%s292 + $0x38] sm:$0xff] %v1100
        $region48: #{tpu_custom_call.1} parent=31 // pred_fallthru
          _
        %s1109 = sand.u32 %s159, 1
        %s1110 = scalar_lea.sflag [#allocation9], %s1109
        %s1111 = sand.u32 %s159, 1
        %s1112 = smul.addr %s1111, 64
        %s1113 = scalar_lea.vmem [#allocation10], %s1112
        // Predicated region
        $region49: #{tpu_custom_call.1} parent=31 // pred_check
          %p1114 = pneg %p169
        $region50: #{tpu_custom_call.1} parent=31 // pred_check_branch
          %1116 = sbr.rel (%p1114) target = $region52
        $region51: #{tpu_custom_call.1} parent=31 // pred_region
          %1118 = vsyncadd %s1110, 0
          %s1119 = smul.addr %s39, 8
          %s1120 = sadd.s32 %s38, %s1119
          %s1121 = smul.addr %s37, 24
          %s1122 = sadd.s32 %s1120, %s1121
          %s1123 = smul.addr %s1122, 8
          %s1124 = scalar_lea.hbm %s5, %s1123
          %s1125 = sshll.u32 %s1113, 4
          %s1126 = int_to_ptr.vmem [resolvable:$true] %s1125
          %s1127 = sshll.u32 %s1124, 4
          %s1128 = int_to_ptr.hbm [resolvable:$true] %s1127
          %1133 = dma.vmem_to_hbm [thread:$0]  %s1126, 1024, %s1128, %s1110, 128, 128, 8
        $region52: #{tpu_custom_call.1} parent=31 // pred_fallthru
          _
      $region32: #{tpu_custom_call.1} parent=5 // pred_fallthru
        _
      %p1134 = scmp.le.s32.totalorder 2, %s26
      // Predicated region
      $region53: #{tpu_custom_call.1} parent=5 // pred_check
        %p1135 = pneg %p1134
      $region54: #{tpu_custom_call.1} parent=5 // pred_check_branch
        %1137 = sbr.rel (%p1135) target = $region56
      $region55: #{tpu_custom_call.1} parent=5 // pred_region
        %s1138 = ssub.s32 %s26, 2
        // Predicated region
        $region57: #{tpu_custom_call.1} parent=55 // pred_check
          %p1139 = pneg %p175
        $region58: #{tpu_custom_call.1} parent=55 // pred_check_branch
          %1141 = sbr.rel (%p1139) target = $region60
        $region59: #{tpu_custom_call.1} parent=55 // pred_region
          %s1142 = sand.u32 %s160, 1
          %s1143 = scalar_lea.sflag [#allocation9], %s1142
          %s1144 = sand.u32 %s160, 1
          %s1145 = smul.addr %s1144, 64
          %s1146 = scalar_lea.vmem [#allocation10], %s1145
          %1148 = dma.done %s1143, 1024
        $region60: #{tpu_custom_call.1} parent=55 // pred_fallthru
          _
      $region56: #{tpu_custom_call.1} parent=5 // pred_fallthru
        _
    $region6: #{tpu_custom_call.1} parent=1 // loop_footer
      %s30 = sadd.s32 1, %s26
    $region7: #{tpu_custom_call.1} parent=1 // loop_footer_branch
      %25 = sbr.rel target = $region3
    $region8: #{tpu_custom_call.1} parent=1 // loop_exit
      _
    %1149 = vsyncpa [#allocation8], 1
    %s1150 = scalar_lea.sflag [#allocation8], 1
    %1151 = vsyncpa %s1150, 1
    %1152 = vsyncpa [#allocation9], 1
    %s1153 = scalar_lea.sflag [#allocation9], 1
    %1154 = vsyncpa %s1153, 1

</llo_original>
